<compile_context>
chip_gen: v7x
topology: tpu7x:2x2x1
jax: 0.10.0
libtpu: 0.0.40
codegen_flags: <defaults>
</compile_context>

<pallas_src>
import functools

import jax
import jax.numpy as jnp
from jax.experimental import pallas as pl
from jax.experimental.pallas import tpu as pltpu


def _round_up(v, m):
    return ((v + m - 1) // m) * m


def _elu(h):
    # ELU(alpha=1): x if x > 0 else exp(x) - 1  (min() keeps exp() in range).
    return jnp.where(h > 0.0, h, jnp.exp(jnp.minimum(h, 0.0)) - 1.0)


def _conv1x1_stack_kernel(num_layers, x_ref, *rest):
    """rest = (w0, b0, w1, b1, ..., w_{L-1}, b_{L-1}, out_ref)."""
    o_ref = rest[-1]
    params = rest[:-1]

    h = x_ref[...].astype(jnp.float32)          # (C_in, TILE)
    for li in range(num_layers):
        w = params[2 * li][...]                 # (C_out_li, C_in_li)  bf16
        b = params[2 * li + 1][...]             # (C_out_li, 1)        f32
        # bf16 x bf16 -> f32 on the MXU; bias + ELU in f32 on the VPU/EUP.
        h = jnp.dot(w, h.astype(jnp.bfloat16),
                    preferred_element_type=jnp.float32) + b
        if li < num_layers - 1:                 # no activation after conv_proj
            h = _elu(h)
    o_ref[...] = h.astype(o_ref.dtype)


def convolutional_forward(x, weights, biases, *, tile_m=8192,
                          vmem_limit_bytes=48 * 1024 * 1024):
    """Forward pass of `Convolutional` (default config, all 1x1 convs).

    x:        (N, C, H, W)  NCHW, C = 3 (color) or 1
    weights:  list of (C_out, C_in) arrays  (== PyTorch conv weight[:, :, 0, 0])
    biases:   list of (C_out,) arrays
    tile_m:   pixels per grid step (rounded to a multiple of 128; sweep per
              generation: ~8K on v7x, up to 16K-32K on v5e/v6e with a higher
              vmem_limit_bytes).
    """
    N, C, H, W = x.shape
    num_layers = len(weights)
    assert len(biases) == num_layers
    assert weights[0].shape[1] == C
    c_out = weights[-1].shape[0]

    # 1x1 convs act per pixel: keep NCHW but collapse H*W onto the lane axis.
    # (N, C, H, W) -> (N, C, H*W) is a free reshape (no transpose).
    HW = H * W
    hw_128 = _round_up(HW, 128)

    # Effective tile: requested size, rounded to 128 lanes, never larger than
    # the (128-rounded) per-image pixel count.  Then re-balance so the padded
    # tail is small (< ~128 lanes per grid step) instead of up to a full tile.
    tile = min(_round_up(max(tile_m, 128), 128), hw_128)
    grid_hw = -(-hw_128 // tile)                 # ceil div
    tile = _round_up(-(-hw_128 // grid_hw), 128)
    hw_pad = grid_hw * tile

    x3 = x.reshape(N, C, HW)
    if hw_pad != HW:
        x3 = jnp.pad(x3, ((0, 0), (0, 0), (0, hw_pad - HW)))

    params = []
    param_specs = []
    for w, b in zip(weights, biases):
        w = w.astype(jnp.bfloat16)               # bf16 operands for the MXU
        b = b.astype(jnp.float32).reshape(-1, 1)
        params += [w, b]
        # Full-array blocks with a constant index_map: DMA'd into VMEM once
        # and kept resident across all grid steps.
        param_specs += [
            pl.BlockSpec(w.shape, lambda n, j: (0, 0)),
            pl.BlockSpec(b.shape, lambda n, j: (0, 0)),
        ]

    out = pl.pallas_call(
        functools.partial(_conv1x1_stack_kernel, num_layers),
        out_shape=jax.ShapeDtypeStruct((N, c_out, hw_pad), x.dtype),
        grid=(N, grid_hw),
        in_specs=[pl.BlockSpec((None, C, tile), lambda n, j: (n, 0, j))]
                 + param_specs,
        out_specs=pl.BlockSpec((None, c_out, tile), lambda n, j: (n, 0, j)),
        compiler_params=pltpu.CompilerParams(
            dimension_semantics=("parallel", "parallel"),  # megacore shardable
            vmem_limit_bytes=vmem_limit_bytes,
        ),
    )(x3, *params)

    if hw_pad != HW:
        out = out[:, :, :HW]
    return out.reshape(N, c_out, H, W)


def convolutional_reference(x, weights, biases):
    """Pure-JAX reference (same math as the PyTorch module, default config)."""
    N, C, H, W = x.shape
    h = jnp.transpose(x, (1, 0, 2, 3)).reshape(C, -1).astype(jnp.float32)
    num_layers = len(weights)
    for li, (w, b) in enumerate(zip(weights, biases)):
        h = w.astype(jnp.float32) @ h + b.astype(jnp.float32)[:, None]
        if li < num_layers - 1:
            h = _elu(h)
    c_out = weights[-1].shape[0]
    return jnp.transpose(h.reshape(c_out, N, H, W), (1, 0, 2, 3)).astype(x.dtype)


# TODO(synk): only the default configuration is implemented (kernel_sizes all 1,
# use_bn/use_in/use_dropout/use_wn False); general k>1 spatial convolution and
# the optional norm / AlphaDropout / weight_norm branches are not translated.


if __name__ == "__main__":
    key = jax.random.PRNGKey(0)

    # is_color=True -> 3 in/out channels; hidden maps are the module defaults.
    N, C, H, W = 2, 3, 16, 16
    layer_maps = [3] + [32, 64, 128, 64, 32] + [3]

    keys = jax.random.split(key, 1 + 2 * (len(layer_maps) - 1))
    x = jax.random.normal(keys[0], (N, C, H, W), dtype=jnp.float32)

    weights, biases = [], []
    for li, (cin, cout) in enumerate(zip(layer_maps[:-1], layer_maps[1:])):
        w = jax.random.normal(keys[1 + 2 * li], (cout, cin), jnp.float32) * (1.0 / (cin ** 0.5))
        b = 0.1 * jax.random.normal(keys[2 + 2 * li], (cout,), jnp.float32)
        weights.append(w)
        biases.append(b)

    y = convolutional_forward(x, weights, biases)
    jax.block_until_ready(y)

    y_ref = convolutional_reference(x, weights, biases)

    assert y.shape == x.shape, (y.shape, x.shape)
    assert y.dtype == x.dtype, (y.dtype, x.dtype)
    max_err = float(jnp.max(jnp.abs(y - y_ref)))
    assert max_err < 5e-2, f"max abs error vs reference: {max_err}"

    print("KERNEL_OK")
</pallas_src>

<mosaic_0001>
module attributes {stable_mosaic.version = 11 : i64} {
  func.func @_conv1x1_stack_kernel(%arg0: i32, %arg1: i32, %arg2: memref<1x3x256xf32, #tpu.memory_space<vmem>>, %arg3: memref<32x3xbf16, #tpu.memory_space<vmem>>, %arg4: memref<32x1xf32, #tpu.memory_space<vmem>>, %arg5: memref<64x32xbf16, #tpu.memory_space<vmem>>, %arg6: memref<64x1xf32, #tpu.memory_space<vmem>>, %arg7: memref<128x64xbf16, #tpu.memory_space<vmem>>, %arg8: memref<128x1xf32, #tpu.memory_space<vmem>>, %arg9: memref<64x128xbf16, #tpu.memory_space<vmem>>, %arg10: memref<64x1xf32, #tpu.memory_space<vmem>>, %arg11: memref<32x64xbf16, #tpu.memory_space<vmem>>, %arg12: memref<32x1xf32, #tpu.memory_space<vmem>>, %arg13: memref<3x32xbf16, #tpu.memory_space<vmem>>, %arg14: memref<3x1xf32, #tpu.memory_space<vmem>>, %arg15: memref<1x3x256xf32, #tpu.memory_space<vmem>>) attributes {dimension_semantics = [#tpu.dimension_semantics<parallel>, #tpu.dimension_semantics<parallel>], iteration_bounds = array<i64: 2, 1>, scalar_prefetch = 0 : i64, scratch_operands = 0 : i64, tpu.core_type = #tpu.core_type<tc>, window_params = [{transform_indices = @transform_0, window_bounds = array<i64: 1, 3, 256>}, {pipeline_mode = #tpu.pipeline_mode<synchronous>, transform_indices = @transform_1, window_bounds = array<i64: 32, 3>}, {pipeline_mode = #tpu.pipeline_mode<synchronous>, transform_indices = @transform_2, window_bounds = array<i64: 32, 1>}, {pipeline_mode = #tpu.pipeline_mode<synchronous>, transform_indices = @transform_3, window_bounds = array<i64: 64, 32>}, {pipeline_mode = #tpu.pipeline_mode<synchronous>, transform_indices = @transform_4, window_bounds = array<i64: 64, 1>}, {pipeline_mode = #tpu.pipeline_mode<synchronous>, transform_indices = @transform_5, window_bounds = array<i64: 128, 64>}, {pipeline_mode = #tpu.pipeline_mode<synchronous>, transform_indices = @transform_6, window_bounds = array<i64: 128, 1>}, {pipeline_mode = #tpu.pipeline_mode<synchronous>, transform_indices = @transform_7, window_bounds = array<i64: 64, 128>}, {pipeline_mode = #tpu.pipeline_mode<synchronous>, transform_indices = @transform_8, window_bounds = array<i64: 64, 1>}, {pipeline_mode = #tpu.pipeline_mode<synchronous>, transform_indices = @transform_9, window_bounds = array<i64: 32, 64>}, {pipeline_mode = #tpu.pipeline_mode<synchronous>, transform_indices = @transform_10, window_bounds = array<i64: 32, 1>}, {pipeline_mode = #tpu.pipeline_mode<synchronous>, transform_indices = @transform_11, window_bounds = array<i64: 3, 32>}, {pipeline_mode = #tpu.pipeline_mode<synchronous>, transform_indices = @transform_12, window_bounds = array<i64: 3, 1>}, {transform_indices = @transform_13, window_bounds = array<i64: 1, 3, 256>}]} {
    %c0 = arith.constant 0 : index
    %c0_0 = arith.constant 0 : index
    %c0_1 = arith.constant 0 : index
    %0 = vector.load %arg2[%c0, %c0_0, %c0_1] : memref<1x3x256xf32, #tpu.memory_space<vmem>>, vector<1x3x256xf32>
    %1 = vector.shape_cast %0 : vector<1x3x256xf32> to vector<3x256xf32>
    %c0_2 = arith.constant 0 : index
    %c0_3 = arith.constant 0 : index
    %2 = vector.load %arg3[%c0_2, %c0_3] : memref<32x3xbf16, #tpu.memory_space<vmem>>, vector<32x3xbf16>
    %c0_4 = arith.constant 0 : index
    %c0_5 = arith.constant 0 : index
    %3 = vector.load %arg4[%c0_4, %c0_5] : memref<32x1xf32, #tpu.memory_space<vmem>>, vector<32x1xf32>
    %4 = arith.truncf %1 : vector<3x256xf32> to vector<3x256xbf16>
    %cst = arith.constant dense<0.000000e+00> : vector<32x256xf32>
    %5 = tpu.matmul %2, %4, %cst {dimension_numbers = #tpu.dot_dimension_numbers<[1], [0], [0], [1], [0, 0, 1, 1], [], []>} : vector<32x3xbf16>, vector<3x256xbf16>, vector<32x256xf32> -> vector<32x256xf32>
    %6 = vector.broadcast %3 : vector<32x1xf32> to vector<32x256xf32>
    %7 = arith.addf %5, %6 : vector<32x256xf32>
    %cst_6 = arith.constant 0.000000e+00 : f32
    %8 = vector.broadcast %cst_6 : f32 to vector<32x256xf32>
    %9 = arith.cmpf ogt, %7, %8 : vector<32x256xf32>
    %cst_7 = arith.constant 0.000000e+00 : f32
    %10 = vector.broadcast %cst_7 : f32 to vector<32x256xf32>
    %11 = arith.minimumf %7, %10 : vector<32x256xf32>
    %12 = math.exp %11 : vector<32x256xf32>
    %cst_8 = arith.constant 1.000000e+00 : f32
    %13 = vector.broadcast %cst_8 : f32 to vector<32x256xf32>
    %14 = arith.subf %12, %13 : vector<32x256xf32>
    %15 = arith.select %9, %7, %14 : vector<32x256xi1>, vector<32x256xf32>
    %c0_9 = arith.constant 0 : index
    %c0_10 = arith.constant 0 : index
    %16 = vector.load %arg5[%c0_9, %c0_10] : memref<64x32xbf16, #tpu.memory_space<vmem>>, vector<64x32xbf16>
    %c0_11 = arith.constant 0 : index
    %c0_12 = arith.constant 0 : index
    %17 = vector.load %arg6[%c0_11, %c0_12] : memref<64x1xf32, #tpu.memory_space<vmem>>, vector<64x1xf32>
    %18 = arith.truncf %15 : vector<32x256xf32> to vector<32x256xbf16>
    %cst_13 = arith.constant dense<0.000000e+00> : vector<64x256xf32>
    %19 = tpu.matmul %16, %18, %cst_13 {dimension_numbers = #tpu.dot_dimension_numbers<[1], [0], [0], [1], [0, 0, 1, 1], [], []>} : vector<64x32xbf16>, vector<32x256xbf16>, vector<64x256xf32> -> vector<64x256xf32>
    %20 = vector.broadcast %17 : vector<64x1xf32> to vector<64x256xf32>
    %21 = arith.addf %19, %20 : vector<64x256xf32>
    %cst_14 = arith.constant 0.000000e+00 : f32
    %22 = vector.broadcast %cst_14 : f32 to vector<64x256xf32>
    %23 = arith.cmpf ogt, %21, %22 : vector<64x256xf32>
    %cst_15 = arith.constant 0.000000e+00 : f32
    %24 = vector.broadcast %cst_15 : f32 to vector<64x256xf32>
    %25 = arith.minimumf %21, %24 : vector<64x256xf32>
    %26 = math.exp %25 : vector<64x256xf32>
    %cst_16 = arith.constant 1.000000e+00 : f32
    %27 = vector.broadcast %cst_16 : f32 to vector<64x256xf32>
    %28 = arith.subf %26, %27 : vector<64x256xf32>
    %29 = arith.select %23, %21, %28 : vector<64x256xi1>, vector<64x256xf32>
    %c0_17 = arith.constant 0 : index
    %c0_18 = arith.constant 0 : index
    %30 = vector.load %arg7[%c0_17, %c0_18] : memref<128x64xbf16, #tpu.memory_space<vmem>>, vector<128x64xbf16>
    %c0_19 = arith.constant 0 : index
    %c0_20 = arith.constant 0 : index
    %31 = vector.load %arg8[%c0_19, %c0_20] : memref<128x1xf32, #tpu.memory_space<vmem>>, vector<128x1xf32>
    %32 = arith.truncf %29 : vector<64x256xf32> to vector<64x256xbf16>
    %cst_21 = arith.constant dense<0.000000e+00> : vector<128x256xf32>
    %33 = tpu.matmul %30, %32, %cst_21 {dimension_numbers = #tpu.dot_dimension_numbers<[1], [0], [0], [1], [0, 0, 1, 1], [], []>} : vector<128x64xbf16>, vector<64x256xbf16>, vector<128x256xf32> -> vector<128x256xf32>
    %34 = vector.broadcast %31 : vector<128x1xf32> to vector<128x256xf32>
    %35 = arith.addf %33, %34 : vector<128x256xf32>
    %cst_22 = arith.constant 0.000000e+00 : f32
    %36 = vector.broadcast %cst_22 : f32 to vector<128x256xf32>
    %37 = arith.cmpf ogt, %35, %36 : vector<128x256xf32>
    %cst_23 = arith.constant 0.000000e+00 : f32
    %38 = vector.broadcast %cst_23 : f32 to vector<128x256xf32>
    %39 = arith.minimumf %35, %38 : vector<128x256xf32>
    %40 = math.exp %39 : vector<128x256xf32>
    %cst_24 = arith.constant 1.000000e+00 : f32
    %41 = vector.broadcast %cst_24 : f32 to vector<128x256xf32>
    %42 = arith.subf %40, %41 : vector<128x256xf32>
    %43 = arith.select %37, %35, %42 : vector<128x256xi1>, vector<128x256xf32>
    %c0_25 = arith.constant 0 : index
    %c0_26 = arith.constant 0 : index
    %44 = vector.load %arg9[%c0_25, %c0_26] : memref<64x128xbf16, #tpu.memory_space<vmem>>, vector<64x128xbf16>
    %c0_27 = arith.constant 0 : index
    %c0_28 = arith.constant 0 : index
    %45 = vector.load %arg10[%c0_27, %c0_28] : memref<64x1xf32, #tpu.memory_space<vmem>>, vector<64x1xf32>
    %46 = arith.truncf %43 : vector<128x256xf32> to vector<128x256xbf16>
    %cst_29 = arith.constant dense<0.000000e+00> : vector<64x256xf32>
    %47 = tpu.matmul %44, %46, %cst_29 {dimension_numbers = #tpu.dot_dimension_numbers<[1], [0], [0], [1], [0, 0, 1, 1], [], []>} : vector<64x128xbf16>, vector<128x256xbf16>, vector<64x256xf32> -> vector<64x256xf32>
    %48 = vector.broadcast %45 : vector<64x1xf32> to vector<64x256xf32>
    %49 = arith.addf %47, %48 : vector<64x256xf32>
    %cst_30 = arith.constant 0.000000e+00 : f32
    %50 = vector.broadcast %cst_30 : f32 to vector<64x256xf32>
    %51 = arith.cmpf ogt, %49, %50 : vector<64x256xf32>
    %cst_31 = arith.constant 0.000000e+00 : f32
    %52 = vector.broadcast %cst_31 : f32 to vector<64x256xf32>
    %53 = arith.minimumf %49, %52 : vector<64x256xf32>
    %54 = math.exp %53 : vector<64x256xf32>
    %cst_32 = arith.constant 1.000000e+00 : f32
    %55 = vector.broadcast %cst_32 : f32 to vector<64x256xf32>
    %56 = arith.subf %54, %55 : vector<64x256xf32>
    %57 = arith.select %51, %49, %56 : vector<64x256xi1>, vector<64x256xf32>
    %c0_33 = arith.constant 0 : index
    %c0_34 = arith.constant 0 : index
    %58 = vector.load %arg11[%c0_33, %c0_34] : memref<32x64xbf16, #tpu.memory_space<vmem>>, vector<32x64xbf16>
    %c0_35 = arith.constant 0 : index
    %c0_36 = arith.constant 0 : index
    %59 = vector.load %arg12[%c0_35, %c0_36] : memref<32x1xf32, #tpu.memory_space<vmem>>, vector<32x1xf32>
    %60 = arith.truncf %57 : vector<64x256xf32> to vector<64x256xbf16>
    %cst_37 = arith.constant dense<0.000000e+00> : vector<32x256xf32>
    %61 = tpu.matmul %58, %60, %cst_37 {dimension_numbers = #tpu.dot_dimension_numbers<[1], [0], [0], [1], [0, 0, 1, 1], [], []>} : vector<32x64xbf16>, vector<64x256xbf16>, vector<32x256xf32> -> vector<32x256xf32>
    %62 = vector.broadcast %59 : vector<32x1xf32> to vector<32x256xf32>
    %63 = arith.addf %61, %62 : vector<32x256xf32>
    %cst_38 = arith.constant 0.000000e+00 : f32
    %64 = vector.broadcast %cst_38 : f32 to vector<32x256xf32>
    %65 = arith.cmpf ogt, %63, %64 : vector<32x256xf32>
    %cst_39 = arith.constant 0.000000e+00 : f32
    %66 = vector.broadcast %cst_39 : f32 to vector<32x256xf32>
    %67 = arith.minimumf %63, %66 : vector<32x256xf32>
    %68 = math.exp %67 : vector<32x256xf32>
    %cst_40 = arith.constant 1.000000e+00 : f32
    %69 = vector.broadcast %cst_40 : f32 to vector<32x256xf32>
    %70 = arith.subf %68, %69 : vector<32x256xf32>
    %71 = arith.select %65, %63, %70 : vector<32x256xi1>, vector<32x256xf32>
    %c0_41 = arith.constant 0 : index
    %c0_42 = arith.constant 0 : index
    %72 = vector.load %arg13[%c0_41, %c0_42] : memref<3x32xbf16, #tpu.memory_space<vmem>>, vector<3x32xbf16>
    %c0_43 = arith.constant 0 : index
    %c0_44 = arith.constant 0 : index
    %73 = vector.load %arg14[%c0_43, %c0_44] : memref<3x1xf32, #tpu.memory_space<vmem>>, vector<3x1xf32>
    %74 = arith.truncf %71 : vector<32x256xf32> to vector<32x256xbf16>
    %cst_45 = arith.constant dense<0.000000e+00> : vector<3x256xf32>
    %75 = tpu.matmul %72, %74, %cst_45 {dimension_numbers = #tpu.dot_dimension_numbers<[1], [0], [0], [1], [0, 0, 1, 1], [], []>} : vector<3x32xbf16>, vector<32x256xbf16>, vector<3x256xf32> -> vector<3x256xf32>
    %76 = vector.broadcast %73 : vector<3x1xf32> to vector<3x256xf32>
    %77 = arith.addf %75, %76 : vector<3x256xf32>
    %c0_46 = arith.constant 0 : index
    %c0_47 = arith.constant 0 : index
    %c0_48 = arith.constant 0 : index
    %78 = vector.load %arg15[%c0_46, %c0_47, %c0_48] : memref<1x3x256xf32, #tpu.memory_space<vmem>>, vector<1x3x256xf32>
    %79 = vector.shape_cast %78 : vector<1x3x256xf32> to vector<3x256xf32>
    %80 = vector.shape_cast %77 : vector<3x256xf32> to vector<1x3x256xf32>
    tpu.vector_store %arg15[%c0_46, %c0_47, %c0_48], %80 {strides = array<i32>} : memref<1x3x256xf32, #tpu.memory_space<vmem>>, vector<1x3x256xf32>,
    return
  }
  func.func @transform_0(%arg0: i32, %arg1: i32) -> (i32, i32, i32) {
    %c0_i32 = arith.constant 0 : i32
    %c0_i32_0 = arith.constant 0 : i32
    return %arg0, %c0_i32, %arg1 : i32, i32, i32
  }
  func.func @transform_1(%arg0: i32, %arg1: i32) -> (i32, i32) {
    %c0_i32 = arith.constant 0 : i32
    %c0_i32_0 = arith.constant 0 : i32
    %c0_i32_1 = arith.constant 0 : i32
    return %c0_i32, %c0_i32_0 : i32, i32
  }
  func.func @transform_2(%arg0: i32, %arg1: i32) -> (i32, i32) {
    %c0_i32 = arith.constant 0 : i32
    %c0_i32_0 = arith.constant 0 : i32
    %c0_i32_1 = arith.constant 0 : i32
    return %c0_i32, %c0_i32_0 : i32, i32
  }
  func.func @transform_3(%arg0: i32, %arg1: i32) -> (i32, i32) {
    %c0_i32 = arith.constant 0 : i32
    %c0_i32_0 = arith.constant 0 : i32
    %c0_i32_1 = arith.constant 0 : i32
    return %c0_i32, %c0_i32_0 : i32, i32
  }
  func.func @transform_4(%arg0: i32, %arg1: i32) -> (i32, i32) {
    %c0_i32 = arith.constant 0 : i32
    %c0_i32_0 = arith.constant 0 : i32
    %c0_i32_1 = arith.constant 0 : i32
    return %c0_i32, %c0_i32_0 : i32, i32
  }
  func.func @transform_5(%arg0: i32, %arg1: i32) -> (i32, i32) {
    %c0_i32 = arith.constant 0 : i32
    %c0_i32_0 = arith.constant 0 : i32
    %c0_i32_1 = arith.constant 0 : i32
    return %c0_i32, %c0_i32_0 : i32, i32
  }
  func.func @transform_6(%arg0: i32, %arg1: i32) -> (i32, i32) {
    %c0_i32 = arith.constant 0 : i32
    %c0_i32_0 = arith.constant 0 : i32
    %c0_i32_1 = arith.constant 0 : i32
    return %c0_i32, %c0_i32_0 : i32, i32
  }
  func.func @transform_7(%arg0: i32, %arg1: i32) -> (i32, i32) {
    %c0_i32 = arith.constant 0 : i32
    %c0_i32_0 = arith.constant 0 : i32
    %c0_i32_1 = arith.constant 0 : i32
    return %c0_i32, %c0_i32_0 : i32, i32
  }
  func.func @transform_8(%arg0: i32, %arg1: i32) -> (i32, i32) {
    %c0_i32 = arith.constant 0 : i32
    %c0_i32_0 = arith.constant 0 : i32
    %c0_i32_1 = arith.constant 0 : i32
    return %c0_i32, %c0_i32_0 : i32, i32
  }
  func.func @transform_9(%arg0: i32, %arg1: i32) -> (i32, i32) {
    %c0_i32 = arith.constant 0 : i32
    %c0_i32_0 = arith.constant 0 : i32
    %c0_i32_1 = arith.constant 0 : i32
    return %c0_i32, %c0_i32_0 : i32, i32
  }
  func.func @transform_10(%arg0: i32, %arg1: i32) -> (i32, i32) {
    %c0_i32 = arith.constant 0 : i32
    %c0_i32_0 = arith.constant 0 : i32
    %c0_i32_1 = arith.constant 0 : i32
    return %c0_i32, %c0_i32_0 : i32, i32
  }
  func.func @transform_11(%arg0: i32, %arg1: i32) -> (i32, i32) {
    %c0_i32 = arith.constant 0 : i32
    %c0_i32_0 = arith.constant 0 : i32
    %c0_i32_1 = arith.constant 0 : i32
    return %c0_i32, %c0_i32_0 : i32, i32
  }
  func.func @transform_12(%arg0: i32, %arg1: i32) -> (i32, i32) {
    %c0_i32 = arith.constant 0 : i32
    %c0_i32_0 = arith.constant 0 : i32
    %c0_i32_1 = arith.constant 0 : i32
    return %c0_i32, %c0_i32_0 : i32, i32
  }
  func.func @transform_13(%arg0: i32, %arg1: i32) -> (i32, i32, i32) {
    %c0_i32 = arith.constant 0 : i32
    %c0_i32_0 = arith.constant 0 : i32
    return %arg0, %c0_i32, %arg1 : i32, i32, i32
  }
}

</mosaic_0001>

<llo_original>
// kernel: tpu_custom_call.1
$region0: #{tpu_custom_call.1}
  #allocation0 [shape = 'u32[]', space=smem, size = 0x4, offset = 0x4, fixed_abs, tag = 'smem constant byte address 0x4 - core index']
  #allocation1 [shape = 'u32[144,128]{1,0:T(1,128)}', space=vmem, size = 0x12000, scoped, tag = 'internal scratch']
  %s0 = inlined_call_operand.vmem [shape: f32[2,3,256], index: 0, kind: input, shape index: {}]
  %s1 = inlined_call_operand.vmem [shape: bf16[32,3], index: 1, kind: input, shape index: {}]
  %s2 = inlined_call_operand.vmem [shape: f32[32,1], index: 2, kind: input, shape index: {}]
  %s3 = inlined_call_operand.vmem [shape: bf16[64,32], index: 3, kind: input, shape index: {}]
  %s4 = inlined_call_operand.vmem [shape: f32[64,1], index: 4, kind: input, shape index: {}]
  %s5 = inlined_call_operand.vmem [shape: bf16[128,64], index: 5, kind: input, shape index: {}]
  %s6 = inlined_call_operand.vmem [shape: f32[128,1], index: 6, kind: input, shape index: {}]
  %s7 = inlined_call_operand.vmem [shape: bf16[64,128], index: 7, kind: input, shape index: {}]
  %s8 = inlined_call_operand.vmem [shape: f32[64,1], index: 8, kind: input, shape index: {}]
  %s9 = inlined_call_operand.vmem [shape: bf16[32,64], index: 9, kind: input, shape index: {}]
  %s10 = inlined_call_operand.vmem [shape: f32[32,1], index: 10, kind: input, shape index: {}]
  %s11 = inlined_call_operand.vmem [shape: bf16[3,32], index: 11, kind: input, shape index: {}]
  %s12 = inlined_call_operand.vmem [shape: f32[3,1], index: 12, kind: input, shape index: {}]
  %s13 = inlined_call_operand.vmem [shape: f32[2,3,256], index: 13, kind: output, shape index: {}]
  %s14 = sld [smem:[#allocation0]]
  $region85: #{tpu_custom_call.1} parent=0
    _
  %s16 = ssub.s32 1, %s14
  %s17 = scalar_select 0, %s16, %s14
  loop: start=0, step=1, limit=4
  $region2: #{tpu_custom_call.1} parent=0 // loop_pre_header
    _
  $region3: #{tpu_custom_call.1} parent=0 // loop_header
    %s19 = sphi 0, %s23
    %p20 = scmp.ge.s32.totalorder %s19, 4
    %s26 = sphi 0, %s38
    %s27 = sphi 0, %s34
    %s28 = sphi 0, %s26
    %s29 = sphi 0, %s27
    %s30 = sphi 0, %s28
    %s31 = sphi 0, %s29
    %s43 = sphi 0, %s45
    %s46 = sphi 0, %s43
    %s47 = sphi 0, %s46
    %s63 = sphi 0, %s47
    %s67 = sphi 0, %s67
    %s69 = sphi 0, %s67
    %s70 = sphi 0, %s69
    %s84 = sphi 0, %s70
    %s88 = sphi 0, %s88
    %s90 = sphi 0, %s88
    %s91 = sphi 0, %s90
    %s105 = sphi 0, %s91
    %s109 = sphi 0, %s109
    %s111 = sphi 0, %s109
    %s112 = sphi 0, %s111
    %s126 = sphi 0, %s112
    %s130 = sphi 0, %s130
    %s132 = sphi 0, %s130
    %s133 = sphi 0, %s132
    %s147 = sphi 0, %s133
    %s151 = sphi 0, %s151
    %s153 = sphi 0, %s151
    %s154 = sphi 0, %s153
    %s168 = sphi 0, %s154
    %s172 = sphi 0, %s172
    %s174 = sphi 0, %s172
    %s175 = sphi 0, %s174
    %s189 = sphi 0, %s175
    %s193 = sphi 0, %s193
    %s195 = sphi 0, %s193
    %s196 = sphi 0, %s195
    %s210 = sphi 0, %s196
    %s214 = sphi 0, %s214
    %s216 = sphi 0, %s214
    %s217 = sphi 0, %s216
    %s231 = sphi 0, %s217
    %s235 = sphi 0, %s235
    %s237 = sphi 0, %s235
    %s238 = sphi 0, %s237
    %s252 = sphi 0, %s238
    %s256 = sphi 0, %s256
    %s258 = sphi 0, %s256
    %s259 = sphi 0, %s258
    %s273 = sphi 0, %s259
    %s277 = sphi 0, %s277
    %s279 = sphi 0, %s277
    %s280 = sphi 0, %s279
    %s294 = sphi 0, %s280
    %s298 = sphi 0, %s298
    %s300 = sphi 0, %s298
    %s301 = sphi 0, %s300
    %s315 = sphi 0, %s301
    %s323 = sphi 0, %s325
    %s326 = sphi 0, %s323
    %s327 = sphi 0, %s326
    %s343 = sphi 0, %s327
  $region4: #{tpu_custom_call.1} parent=0 // loop_header_branch
    %22 = sbr.rel (%p20) target = $region8
  $region5: #{tpu_custom_call.1} parent=0 // loop_body
    %s24 = ssub.s32 %s19, 1
    %s25 = ssub.s32 %s19, 2
    %s32 = sadd.s32 1, %s27
    %p33 = scmp.ge.s32.totalorder %s32, 1
    %s34 = scalar_select %p33, 0, %s32
    %s35 = sadd.s32 1, %s26
    %s36 = scalar_select %p33, %s35, %s26
    %p37 = scmp.ge.s32.totalorder %s36, 2
    %s38 = scalar_select %p37, 0, %s36
    %s39 = ssub.s32 %s26, %s38
    %s40 = ssub.s32 %s27, %s34
    %s41 = sor.u32 %s39, %s40
    %p42 = scmp.eq.s32.totalorder %s41, 0
    %s44 = sadd.s32 %s43, 1
    %s45 = scalar_select %p42, %s43, %s44
    %p48 = pneg %p42
    %p49 = scmp.eq.s32.totalorder %s19, 1
    %p50 = por %p48, %p49
    %p51 = scmp.ne.s32.totalorder %s43, %s46
    %p52 = scmp.eq.s32.totalorder %s19, 0
    %p53 = por %p51, %p52
    %p54 = scmp.ne.s32.totalorder %s43, %s46
    %p55 = scmp.eq.s32.totalorder %s24, 1
    %p56 = por %p54, %p55
    %p57 = scmp.ne.s32.totalorder %s46, %s47
    %p58 = scmp.eq.s32.totalorder %s24, 0
    %p59 = por %p57, %p58
    %p60 = scmp.ne.s32.totalorder %s46, %s47
    %p61 = scmp.eq.s32.totalorder %s25, 1
    %p62 = por %p60, %p61
    %p64 = scmp.ne.s32.totalorder %s47, %s63
    %p65 = scmp.eq.s32.totalorder %s25, 0
    %p66 = por %p64, %p65
    %s68 = sadd.s32 %s67, 1
    %p71 = scmp.eq.s32.totalorder %s19, 1
    %p72 = scmp.ne.s32.totalorder %s67, %s69
    %p73 = scmp.eq.s32.totalorder %s19, 0
    %p74 = por %p72, %p73
    %p75 = scmp.ne.s32.totalorder %s67, %s69
    %p76 = scmp.eq.s32.totalorder %s24, 1
    %p77 = por %p75, %p76
    %p78 = scmp.ne.s32.totalorder %s69, %s70
    %p79 = scmp.eq.s32.totalorder %s24, 0
    %p80 = por %p78, %p79
    %p81 = scmp.ne.s32.totalorder %s69, %s70
    %p82 = scmp.eq.s32.totalorder %s25, 1
    %p83 = por %p81, %p82
    %p85 = scmp.ne.s32.totalorder %s70, %s84
    %p86 = scmp.eq.s32.totalorder %s25, 0
    %p87 = por %p85, %p86
    %s89 = sadd.s32 %s88, 1
    %p92 = scmp.eq.s32.totalorder %s19, 1
    %p93 = scmp.ne.s32.totalorder %s88, %s90
    %p94 = scmp.eq.s32.totalorder %s19, 0
    %p95 = por %p93, %p94
    %p96 = scmp.ne.s32.totalorder %s88, %s90
    %p97 = scmp.eq.s32.totalorder %s24, 1
    %p98 = por %p96, %p97
    %p99 = scmp.ne.s32.totalorder %s90, %s91
    %p100 = scmp.eq.s32.totalorder %s24, 0
    %p101 = por %p99, %p100
    %p102 = scmp.ne.s32.totalorder %s90, %s91
    %p103 = scmp.eq.s32.totalorder %s25, 1
    %p104 = por %p102, %p103
    %p106 = scmp.ne.s32.totalorder %s91, %s105
    %p107 = scmp.eq.s32.totalorder %s25, 0
    %p108 = por %p106, %p107
    %s110 = sadd.s32 %s109, 1
    %p113 = scmp.eq.s32.totalorder %s19, 1
    %p114 = scmp.ne.s32.totalorder %s109, %s111
    %p115 = scmp.eq.s32.totalorder %s19, 0
    %p116 = por %p114, %p115
    %p117 = scmp.ne.s32.totalorder %s109, %s111
    %p118 = scmp.eq.s32.totalorder %s24, 1
    %p119 = por %p117, %p118
    %p120 = scmp.ne.s32.totalorder %s111, %s112
    %p121 = scmp.eq.s32.totalorder %s24, 0
    %p122 = por %p120, %p121
    %p123 = scmp.ne.s32.totalorder %s111, %s112
    %p124 = scmp.eq.s32.totalorder %s25, 1
    %p125 = por %p123, %p124
    %p127 = scmp.ne.s32.totalorder %s112, %s126
    %p128 = scmp.eq.s32.totalorder %s25, 0
    %p129 = por %p127, %p128
    %s131 = sadd.s32 %s130, 1
    %p134 = scmp.eq.s32.totalorder %s19, 1
    %p135 = scmp.ne.s32.totalorder %s130, %s132
    %p136 = scmp.eq.s32.totalorder %s19, 0
    %p137 = por %p135, %p136
    %p138 = scmp.ne.s32.totalorder %s130, %s132
    %p139 = scmp.eq.s32.totalorder %s24, 1
    %p140 = por %p138, %p139
    %p141 = scmp.ne.s32.totalorder %s132, %s133
    %p142 = scmp.eq.s32.totalorder %s24, 0
    %p143 = por %p141, %p142
    %p144 = scmp.ne.s32.totalorder %s132, %s133
    %p145 = scmp.eq.s32.totalorder %s25, 1
    %p146 = por %p144, %p145
    %p148 = scmp.ne.s32.totalorder %s133, %s147
    %p149 = scmp.eq.s32.totalorder %s25, 0
    %p150 = por %p148, %p149
    %s152 = sadd.s32 %s151, 1
    %p155 = scmp.eq.s32.totalorder %s19, 1
    %p156 = scmp.ne.s32.totalorder %s151, %s153
    %p157 = scmp.eq.s32.totalorder %s19, 0
    %p158 = por %p156, %p157
    %p159 = scmp.ne.s32.totalorder %s151, %s153
    %p160 = scmp.eq.s32.totalorder %s24, 1
    %p161 = por %p159, %p160
    %p162 = scmp.ne.s32.totalorder %s153, %s154
    %p163 = scmp.eq.s32.totalorder %s24, 0
    %p164 = por %p162, %p163
    %p165 = scmp.ne.s32.totalorder %s153, %s154
    %p166 = scmp.eq.s32.totalorder %s25, 1
    %p167 = por %p165, %p166
    %p169 = scmp.ne.s32.totalorder %s154, %s168
    %p170 = scmp.eq.s32.totalorder %s25, 0
    %p171 = por %p169, %p170
    %s173 = sadd.s32 %s172, 1
    %p176 = scmp.eq.s32.totalorder %s19, 1
    %p177 = scmp.ne.s32.totalorder %s172, %s174
    %p178 = scmp.eq.s32.totalorder %s19, 0
    %p179 = por %p177, %p178
    %p180 = scmp.ne.s32.totalorder %s172, %s174
    %p181 = scmp.eq.s32.totalorder %s24, 1
    %p182 = por %p180, %p181
    %p183 = scmp.ne.s32.totalorder %s174, %s175
    %p184 = scmp.eq.s32.totalorder %s24, 0
    %p185 = por %p183, %p184
    %p186 = scmp.ne.s32.totalorder %s174, %s175
    %p187 = scmp.eq.s32.totalorder %s25, 1
    %p188 = por %p186, %p187
    %p190 = scmp.ne.s32.totalorder %s175, %s189
    %p191 = scmp.eq.s32.totalorder %s25, 0
    %p192 = por %p190, %p191
    %s194 = sadd.s32 %s193, 1
    %p197 = scmp.eq.s32.totalorder %s19, 1
    %p198 = scmp.ne.s32.totalorder %s193, %s195
    %p199 = scmp.eq.s32.totalorder %s19, 0
    %p200 = por %p198, %p199
    %p201 = scmp.ne.s32.totalorder %s193, %s195
    %p202 = scmp.eq.s32.totalorder %s24, 1
    %p203 = por %p201, %p202
    %p204 = scmp.ne.s32.totalorder %s195, %s196
    %p205 = scmp.eq.s32.totalorder %s24, 0
    %p206 = por %p204, %p205
    %p207 = scmp.ne.s32.totalorder %s195, %s196
    %p208 = scmp.eq.s32.totalorder %s25, 1
    %p209 = por %p207, %p208
    %p211 = scmp.ne.s32.totalorder %s196, %s210
    %p212 = scmp.eq.s32.totalorder %s25, 0
    %p213 = por %p211, %p212
    %s215 = sadd.s32 %s214, 1
    %p218 = scmp.eq.s32.totalorder %s19, 1
    %p219 = scmp.ne.s32.totalorder %s214, %s216
    %p220 = scmp.eq.s32.totalorder %s19, 0
    %p221 = por %p219, %p220
    %p222 = scmp.ne.s32.totalorder %s214, %s216
    %p223 = scmp.eq.s32.totalorder %s24, 1
    %p224 = por %p222, %p223
    %p225 = scmp.ne.s32.totalorder %s216, %s217
    %p226 = scmp.eq.s32.totalorder %s24, 0
    %p227 = por %p225, %p226
    %p228 = scmp.ne.s32.totalorder %s216, %s217
    %p229 = scmp.eq.s32.totalorder %s25, 1
    %p230 = por %p228, %p229
    %p232 = scmp.ne.s32.totalorder %s217, %s231
    %p233 = scmp.eq.s32.totalorder %s25, 0
    %p234 = por %p232, %p233
    %s236 = sadd.s32 %s235, 1
    %p239 = scmp.eq.s32.totalorder %s19, 1
    %p240 = scmp.ne.s32.totalorder %s235, %s237
    %p241 = scmp.eq.s32.totalorder %s19, 0
    %p242 = por %p240, %p241
    %p243 = scmp.ne.s32.totalorder %s235, %s237
    %p244 = scmp.eq.s32.totalorder %s24, 1
    %p245 = por %p243, %p244
    %p246 = scmp.ne.s32.totalorder %s237, %s238
    %p247 = scmp.eq.s32.totalorder %s24, 0
    %p248 = por %p246, %p247
    %p249 = scmp.ne.s32.totalorder %s237, %s238
    %p250 = scmp.eq.s32.totalorder %s25, 1
    %p251 = por %p249, %p250
    %p253 = scmp.ne.s32.totalorder %s238, %s252
    %p254 = scmp.eq.s32.totalorder %s25, 0
    %p255 = por %p253, %p254
    %s257 = sadd.s32 %s256, 1
    %p260 = scmp.eq.s32.totalorder %s19, 1
    %p261 = scmp.ne.s32.totalorder %s256, %s258
    %p262 = scmp.eq.s32.totalorder %s19, 0
    %p263 = por %p261, %p262
    %p264 = scmp.ne.s32.totalorder %s256, %s258
    %p265 = scmp.eq.s32.totalorder %s24, 1
    %p266 = por %p264, %p265
    %p267 = scmp.ne.s32.totalorder %s258, %s259
    %p268 = scmp.eq.s32.totalorder %s24, 0
    %p269 = por %p267, %p268
    %p270 = scmp.ne.s32.totalorder %s258, %s259
    %p271 = scmp.eq.s32.totalorder %s25, 1
    %p272 = por %p270, %p271
    %p274 = scmp.ne.s32.totalorder %s259, %s273
    %p275 = scmp.eq.s32.totalorder %s25, 0
    %p276 = por %p274, %p275
    %s278 = sadd.s32 %s277, 1
    %p281 = scmp.eq.s32.totalorder %s19, 1
    %p282 = scmp.ne.s32.totalorder %s277, %s279
    %p283 = scmp.eq.s32.totalorder %s19, 0
    %p284 = por %p282, %p283
    %p285 = scmp.ne.s32.totalorder %s277, %s279
    %p286 = scmp.eq.s32.totalorder %s24, 1
    %p287 = por %p285, %p286
    %p288 = scmp.ne.s32.totalorder %s279, %s280
    %p289 = scmp.eq.s32.totalorder %s24, 0
    %p290 = por %p288, %p289
    %p291 = scmp.ne.s32.totalorder %s279, %s280
    %p292 = scmp.eq.s32.totalorder %s25, 1
    %p293 = por %p291, %p292
    %p295 = scmp.ne.s32.totalorder %s280, %s294
    %p296 = scmp.eq.s32.totalorder %s25, 0
    %p297 = por %p295, %p296
    %s299 = sadd.s32 %s298, 1
    %p302 = scmp.eq.s32.totalorder %s19, 1
    %p303 = scmp.ne.s32.totalorder %s298, %s300
    %p304 = scmp.eq.s32.totalorder %s19, 0
    %p305 = por %p303, %p304
    %p306 = scmp.ne.s32.totalorder %s298, %s300
    %p307 = scmp.eq.s32.totalorder %s24, 1
    %p308 = por %p306, %p307
    %p309 = scmp.ne.s32.totalorder %s300, %s301
    %p310 = scmp.eq.s32.totalorder %s24, 0
    %p311 = por %p309, %p310
    %p312 = scmp.ne.s32.totalorder %s300, %s301
    %p313 = scmp.eq.s32.totalorder %s25, 1
    %p314 = por %p312, %p313
    %p316 = scmp.ne.s32.totalorder %s301, %s315
    %p317 = scmp.eq.s32.totalorder %s25, 0
    %p318 = por %p316, %p317
    %s319 = ssub.s32 %s26, %s38
    %s320 = ssub.s32 %s27, %s34
    %s321 = sor.u32 %s319, %s320
    %p322 = scmp.eq.s32.totalorder %s321, 0
    %s324 = sadd.s32 %s323, 1
    %s325 = scalar_select %p322, %s323, %s324
    %p328 = pneg %p322
    %p329 = scmp.eq.s32.totalorder %s19, 1
    %p330 = por %p328, %p329
    %p331 = scmp.ne.s32.totalorder %s323, %s326
    %p332 = scmp.eq.s32.totalorder %s19, 0
    %p333 = por %p331, %p332
    %p334 = scmp.ne.s32.totalorder %s323, %s326
    %p335 = scmp.eq.s32.totalorder %s24, 1
    %p336 = por %p334, %p335
    %p337 = scmp.ne.s32.totalorder %s326, %s327
    %p338 = scmp.eq.s32.totalorder %s24, 0
    %p339 = por %p337, %p338
    %p340 = scmp.ne.s32.totalorder %s326, %s327
    %p341 = scmp.eq.s32.totalorder %s25, 1
    %p342 = por %p340, %p341
    %p344 = scmp.ne.s32.totalorder %s327, %s343
    %p345 = scmp.eq.s32.totalorder %s25, 0
    %p346 = por %p344, %p345
    %p347 = scmp.le.s32.totalorder 1, %s19
    %p348 = scmp.lt.s32.totalorder %s19, 3
    %p349 = pnand %p347, %p348
    %p350 = pneg %p349
    // Predicated region
    $region9: #{tpu_custom_call.1} parent=5 // pred_check
      _
    $region10: #{tpu_custom_call.1} parent=5 // pred_check_branch
      %352 = sbr.rel (%p349) target = $region12
    $region11: #{tpu_custom_call.1} parent=5 // pred_region
      %s353 = ssub.s32 %s19, 1
      // Predicated region
      $region13: #{tpu_custom_call.1} parent=11 // pred_check
        %p354 = pneg %p80
      $region14: #{tpu_custom_call.1} parent=11 // pred_check_branch
        %356 = sbr.rel (%p354) target = $region16
      $region15: #{tpu_custom_call.1} parent=11 // pred_region
        _
      $region16: #{tpu_custom_call.1} parent=11 // pred_fallthru
        _
      // Predicated region
      $region17: #{tpu_custom_call.1} parent=11 // pred_check
        %p357 = pneg %p101
      $region18: #{tpu_custom_call.1} parent=11 // pred_check_branch
        %359 = sbr.rel (%p357) target = $region20
      $region19: #{tpu_custom_call.1} parent=11 // pred_region
        _
      $region20: #{tpu_custom_call.1} parent=11 // pred_fallthru
        _
      // Predicated region
      $region21: #{tpu_custom_call.1} parent=11 // pred_check
        %p360 = pneg %p122
      $region22: #{tpu_custom_call.1} parent=11 // pred_check_branch
        %362 = sbr.rel (%p360) target = $region24
      $region23: #{tpu_custom_call.1} parent=11 // pred_region
        _
      $region24: #{tpu_custom_call.1} parent=11 // pred_fallthru
        _
      // Predicated region
      $region25: #{tpu_custom_call.1} parent=11 // pred_check
        %p363 = pneg %p143
      $region26: #{tpu_custom_call.1} parent=11 // pred_check_branch
        %365 = sbr.rel (%p363) target = $region28
      $region27: #{tpu_custom_call.1} parent=11 // pred_region
        _
      $region28: #{tpu_custom_call.1} parent=11 // pred_fallthru
        _
      // Predicated region
      $region29: #{tpu_custom_call.1} parent=11 // pred_check
        %p366 = pneg %p164
      $region30: #{tpu_custom_call.1} parent=11 // pred_check_branch
        %368 = sbr.rel (%p366) target = $region32
      $region31: #{tpu_custom_call.1} parent=11 // pred_region
        _
      $region32: #{tpu_custom_call.1} parent=11 // pred_fallthru
        _
      // Predicated region
      $region33: #{tpu_custom_call.1} parent=11 // pred_check
        %p369 = pneg %p185
      $region34: #{tpu_custom_call.1} parent=11 // pred_check_branch
        %371 = sbr.rel (%p369) target = $region36
      $region35: #{tpu_custom_call.1} parent=11 // pred_region
        _
      $region36: #{tpu_custom_call.1} parent=11 // pred_fallthru
        _
      // Predicated region
      $region37: #{tpu_custom_call.1} parent=11 // pred_check
        %p372 = pneg %p206
      $region38: #{tpu_custom_call.1} parent=11 // pred_check_branch
        %374 = sbr.rel (%p372) target = $region40
      $region39: #{tpu_custom_call.1} parent=11 // pred_region
        _
      $region40: #{tpu_custom_call.1} parent=11 // pred_fallthru
        _
      // Predicated region
      $region41: #{tpu_custom_call.1} parent=11 // pred_check
        %p375 = pneg %p227
      $region42: #{tpu_custom_call.1} parent=11 // pred_check_branch
        %377 = sbr.rel (%p375) target = $region44
      $region43: #{tpu_custom_call.1} parent=11 // pred_region
        _
      $region44: #{tpu_custom_call.1} parent=11 // pred_fallthru
        _
      // Predicated region
      $region45: #{tpu_custom_call.1} parent=11 // pred_check
        %p378 = pneg %p248
      $region46: #{tpu_custom_call.1} parent=11 // pred_check_branch
        %380 = sbr.rel (%p378) target = $region48
      $region47: #{tpu_custom_call.1} parent=11 // pred_region
        _
      $region48: #{tpu_custom_call.1} parent=11 // pred_fallthru
        _
      // Predicated region
      $region49: #{tpu_custom_call.1} parent=11 // pred_check
        %p381 = pneg %p269
      $region50: #{tpu_custom_call.1} parent=11 // pred_check_branch
        %383 = sbr.rel (%p381) target = $region52
      $region51: #{tpu_custom_call.1} parent=11 // pred_region
        _
      $region52: #{tpu_custom_call.1} parent=11 // pred_fallthru
        _
      // Predicated region
      $region53: #{tpu_custom_call.1} parent=11 // pred_check
        %p384 = pneg %p290
      $region54: #{tpu_custom_call.1} parent=11 // pred_check_branch
        %386 = sbr.rel (%p384) target = $region56
      $region55: #{tpu_custom_call.1} parent=11 // pred_region
        _
      $region56: #{tpu_custom_call.1} parent=11 // pred_fallthru
        _
      // Predicated region
      $region57: #{tpu_custom_call.1} parent=11 // pred_check
        %p387 = pneg %p311
      $region58: #{tpu_custom_call.1} parent=11 // pred_check_branch
        %389 = sbr.rel (%p387) target = $region60
      $region59: #{tpu_custom_call.1} parent=11 // pred_region
        _
      $region60: #{tpu_custom_call.1} parent=11 // pred_fallthru
        _
    $region12: #{tpu_custom_call.1} parent=5 // pred_fallthru
      _
    %p390 = scmp.lt.s32.totalorder %s19, 2
    // Predicated region
    $region61: #{tpu_custom_call.1} parent=5 // pred_check
      %p391 = pneg %p390
    $region62: #{tpu_custom_call.1} parent=5 // pred_check_branch
      %393 = sbr.rel (%p391) target = $region64
    $region63: #{tpu_custom_call.1} parent=5 // pred_region
      // Predicated region
      $region65: #{tpu_custom_call.1} parent=63 // pred_check
        %p394 = pneg %p53
      $region66: #{tpu_custom_call.1} parent=63 // pred_check_branch
        %396 = sbr.rel (%p394) target = $region68
      $region67: #{tpu_custom_call.1} parent=63 // pred_region
        %s397 = smul.u32 2, %s27
        %p398 = scmp.lt.s32.totalorder %s26, 1
        %s399 = scalar_select %p398, %s26, 1
        %p400 = scmp.lt.s32.totalorder %s397, 1
        %s401 = scalar_select %p400, %s397, 1
        %s402 = smul.addr %s399, 2
        %s403 = sadd.s32 %s401, %s402
        %s404 = smul.addr %s403, 4
        %s405 = scalar_lea.vmem %s0, %s404
        %s406 = smul.u32 2, %s27
      $region68: #{tpu_custom_call.1} parent=63 // pred_fallthru
        _
    $region64: #{tpu_custom_call.1} parent=5 // pred_fallthru
      _
    %p407 = scmp.le.s32.totalorder 1, %s19
    %p408 = scmp.lt.s32.totalorder %s19, 3
    %p409 = pnand %p407, %p408
    %p410 = pneg %p409
    // Predicated region
    $region69: #{tpu_custom_call.1} parent=5 // pred_check
      _
    $region70: #{tpu_custom_call.1} parent=5 // pred_check_branch
      %412 = sbr.rel (%p409) target = $region72
    $region71: #{tpu_custom_call.1} parent=5 // pred_region
      %s413 = ssub.s32 %s19, 1
      %s414 = smul.u32 2, %s29
      %p415 = scmp.lt.s32.totalorder %s28, 1
      %s416 = scalar_select %p415, %s28, 1
      %p417 = scmp.lt.s32.totalorder %s414, 1
      %s418 = scalar_select %p417, %s414, 1
      %s419 = smul.addr %s416, 2
      %s420 = sadd.s32 %s418, %s419
      %s421 = smul.addr %s420, 4
      %s422 = scalar_lea.vmem %s0, %s421
      %p423 = pneg %p59
      %p424 = pneg %p56
      %p425 = pneg %p80
      %p426 = pneg %p77
      %p427 = pneg %p101
      %p428 = pneg %p98
      %p429 = pneg %p122
      %p430 = pneg %p119
      %p431 = pneg %p143
      %p432 = pneg %p140
      %p433 = pneg %p164
      %p434 = pneg %p161
      %p435 = pneg %p185
      %p436 = pneg %p182
      %p437 = pneg %p206
      %p438 = pneg %p203
      %p439 = pneg %p227
      %p440 = pneg %p224
      %p441 = pneg %p248
      %p442 = pneg %p245
      %p443 = pneg %p269
      %p444 = pneg %p266
      %p445 = pneg %p290
      %p446 = pneg %p287
      %p447 = pneg %p311
      %p448 = pneg %p308
      %p449 = pneg %p339
      %p450 = pneg %p336
      %s451 = smul.u32 2, %s29
      %p452 = scmp.lt.s32.totalorder %s28, 1
      %s453 = scalar_select %p452, %s28, 1
      %p454 = scmp.lt.s32.totalorder %s451, 1
      %s455 = scalar_select %p454, %s451, 1
      %s456 = smul.addr %s453, 2
      %s457 = sadd.s32 %s455, %s456
      %s458 = smul.addr %s457, 4
      %s459 = scalar_lea.vmem %s13, %s458
      %s460 = smul.u32 2, %s29
      %p461 = scmp.lt.s32.totalorder %s28, 1
      %s462 = scalar_select %p461, %s28, 1
      %p463 = scmp.lt.s32.totalorder %s460, 1
      %s464 = scalar_select %p463, %s460, 1
      %s465 = smul.addr %s462, 2
      %s466 = sadd.s32 %s464, %s465
      %s467 = smul.addr %s466, 4
      %s468 = scalar_lea.vmem %s0, %s467
      %s469 = smul.u32 2, %s29
      %s470 = smul.u32 2, %s29
      %p471 = scmp.lt.s32.totalorder %s28, 1
      %s472 = scalar_select %p471, %s28, 1
      %p473 = scmp.lt.s32.totalorder %s470, 1
      %s474 = scalar_select %p473, %s470, 1
      %s475 = smul.addr %s472, 2
      %s476 = sadd.s32 %s474, %s475
      %s477 = smul.addr %s476, 4
      %s478 = scalar_lea.vmem %s13, %s477
      %s479 = smul.u32 2, %s29
      %v481 = vld [vmem:[%s468] sm:$0x77]
      %v482 = vld [vmem:[%s1] sm:$0xf]
      %v483 = vld [vmem:[%s1 + $0x4] sm:$0xf]
      %v484 = vld [vmem:[%s1 + $0x8] sm:$0xf]
      %v485 = vld [vmem:[%s1 + $0xc] sm:$0xf]
      %v486 = vld [vmem:[%s2] sm:$0xff]
      %v487 = vld [vmem:[%s2 + $0x8] sm:$0xff]
      %v488 = vld [vmem:[%s2 + $0x10] sm:$0xff]
      %v489 = vld [vmem:[%s2 + $0x18] sm:$0xff]
      %v491 = vcombine.high %v481, %v481
      %v493 = vpack.c.bf16 %v481, %v481
      %v494 = vpack.c.bf16 %v491, %v491
      %496 = vset.pattern.permute.xlu0 0
      %497 = vperm.xlu0 %496, %v486
      %v498 = vpop.permute.xlu0 %497
      %501 = vset.pattern.permute.xlu0 0
      %502 = vperm.xlu0 %501, %v487
      %v503 = vpop.permute.xlu0 %502
      %506 = vset.pattern.permute.xlu0 0
      %507 = vperm.xlu0 %506, %v488
      %v508 = vpop.permute.xlu0 %507
      %511 = vset.pattern.permute.xlu0 0
      %512 = vperm.xlu0 %511, %v489
      %v513 = vpop.permute.xlu0 %512
      %v519 = vunpack.c.l.b16 %v482
      %v520 = vunpack.c.l.b16 %v483
      %v521 = vunpack.c.l.b16 %v484
      %v522 = vunpack.c.l.b16 %v485
      %v523 = vpack.c.b16 %v520, %v519
      %v524 = vpack.c.b16 %v522, %v521
      %vm525 = vcmask 23552
      %v527 = vsel %vm525, %v523, 0
      %v530 = vsel %vm525, %v524, 0
      %vm532 = vcmask 1040384
      %vm533 = vcmask 1041408
      %v534 = vsel %vm532, 4294967295, 65535
      %v535 = vsel %vm533, %v534, 0
      %v537 = vand.u32 %v493, %v535
      %v540 = vand.u32 %v494, %v535
      %542 = vmatprep.subr.bf16.mxu0 %v540
      %543 = vmatpush1.bf16.msra.mxu0 %v537
      %544 = vmatprep.subr.bf16.mxu0 0
      %545 = vmatpush1.bf16.msra.mxu0 0
      %546 = vmatprep.subr.bf16.mxu0 0
      %547 = vmatpush1.bf16.msra.mxu0 0
      %548 = vmatprep.subr.bf16.mxu0 0
      %549 = vmatpush1.bf16.msra.mxu0 0
      %550 = vmatprep.subr.bf16.mxu0 0
      %551 = vmatpush1.bf16.msra.mxu0 0
      %552 = vmatprep.subr.bf16.mxu0 0
      %553 = vmatpush1.bf16.msra.mxu0 0
      %554 = vmatprep.subr.bf16.mxu0 0
      %555 = vmatpush1.bf16.msra.mxu0 0
      %556 = vmatprep.subr.bf16.mxu0 0
      %557 = vmatpush1.bf16.msra.mxu0 0
      %558 = vmatprep.subr.bf16.mxu0 0
      %559 = vmatpush1.bf16.msra.mxu0 0
      %560 = vmatprep.subr.bf16.mxu0 0
      %561 = vmatpush1.bf16.msra.mxu0 0
      %562 = vmatprep.subr.bf16.mxu0 0
      %563 = vmatpush1.bf16.msra.mxu0 0
      %564 = vmatprep.subr.bf16.mxu0 0
      %565 = vmatpush1.bf16.msra.mxu0 0
      %566 = vmatprep.subr.bf16.mxu0 0
      %567 = vmatpush1.bf16.msra.mxu0 0
      %568 = vmatprep.subr.bf16.mxu0 0
      %569 = vmatpush1.bf16.msra.mxu0 0
      %570 = vmatprep.subr.bf16.mxu0 0
      %571 = vmatpush1.bf16.msra.mxu0 0
      %572 = vmatprep.subr.bf16.mxu0 0
      %573 = vmatpush1.bf16.msra.mxu0 0
      %574 = vmatprep.mubr.bf16.mxu0 0
      %575 = vmatmul.mubr.bf16.gmra.mrb[0].mxu0 %v527
      %v576 = vpop.f32.mrb[0].mxu0
      %v577 = vadd.f32 %v498, %v576
      %v578 = vpop.f32.mrb[0].mxu0
      %v579 = vadd.f32 %v498, %v578
      %v580 = vpop.f32.mrb[0].mxu0
      %v581 = vadd.f32 %v503, %v580
      %v582 = vpop.f32.mrb[0].mxu0
      %v583 = vadd.f32 %v503, %v582
      %584 = vmatprep.mubr.bf16.mxu0 0
      %585 = vmatmul.mubr.bf16.gmra.mrb[0].mxu0 %v530
      %v586 = vpop.f32.mrb[0].mxu0
      %v587 = vadd.f32 %v508, %v586
      %v588 = vpop.f32.mrb[0].mxu0
      %v589 = vadd.f32 %v508, %v588
      %v590 = vpop.f32.mrb[0].mxu0
      %v591 = vadd.f32 %v513, %v590
      %v592 = vpop.f32.mrb[0].mxu0
      %v593 = vadd.f32 %v513, %v592
      %594 = vdwg.mxu0
      %vm595 = vcmp.gt.f32.partialorder %v577, 0.0
      %vm596 = vcmp.gt.f32.partialorder %v579, 0.0
      %vm597 = vcmp.gt.f32.partialorder %v581, 0.0
      %vm598 = vcmp.gt.f32.partialorder %v583, 0.0
      %vm599 = vcmp.gt.f32.partialorder %v587, 0.0
      %vm600 = vcmp.gt.f32.partialorder %v589, 0.0
      %vm601 = vcmp.gt.f32.partialorder %v591, 0.0
      %vm602 = vcmp.gt.f32.partialorder %v593, 0.0
      %v603 = vmin.f32 %v577, 0.0
      %v604 = vmin.f32 %v579, 0.0
      %v605 = vmin.f32 %v581, 0.0
      %v606 = vmin.f32 %v583, 0.0
      %v607 = vmin.f32 %v587, 0.0
      %v608 = vmin.f32 %v589, 0.0
      %v609 = vmin.f32 %v591, 0.0
      %v610 = vmin.f32 %v593, 0.0
      %v611 = vmul.f32 %v603, 1.442695
      %v612 = vpow.pop %v611
      %v613 = vmul.f32 %v604, 1.442695
      %v614 = vpow.pop %v613
      %v615 = vmul.f32 %v605, 1.442695
      %v616 = vpow.pop %v615
      %v617 = vmul.f32 %v606, 1.442695
      %v618 = vpow.pop %v617
      %v619 = vmul.f32 %v607, 1.442695
      %v620 = vpow.pop %v619
      %v621 = vmul.f32 %v608, 1.442695
      %v622 = vpow.pop %v621
      %v623 = vmul.f32 %v609, 1.442695
      %v624 = vpow.pop %v623
      %v625 = vmul.f32 %v610, 1.442695
      %v626 = vpow.pop %v625
      %v627 = vsub.f32 %v612, 1.0
      %v628 = vsub.f32 %v614, 1.0
      %v629 = vsub.f32 %v616, 1.0
      %v630 = vsub.f32 %v618, 1.0
      %v631 = vsub.f32 %v620, 1.0
      %v632 = vsub.f32 %v622, 1.0
      %v633 = vsub.f32 %v624, 1.0
      %v634 = vsub.f32 %v626, 1.0
      %v635 = vsel %vm595, %v577, %v627
      %v636 = vsel %vm596, %v579, %v628
      %v637 = vsel %vm597, %v581, %v629
      %v638 = vsel %vm598, %v583, %v630
      %v639 = vsel %vm599, %v587, %v631
      %v640 = vsel %vm600, %v589, %v632
      %v641 = vsel %vm601, %v591, %v633
      %v642 = vsel %vm602, %v593, %v634
      %v643 = vld [vmem:[%s3] sm:$0xf]
      %v644 = vld [vmem:[%s3 + $0x4] sm:$0xf]
      %v645 = vld [vmem:[%s3 + $0x8] sm:$0xf]
      %v646 = vld [vmem:[%s3 + $0xc] sm:$0xf]
      %v647 = vld [vmem:[%s3 + $0x10] sm:$0xf]
      %v648 = vld [vmem:[%s3 + $0x14] sm:$0xf]
      %v649 = vld [vmem:[%s3 + $0x18] sm:$0xf]
      %v650 = vld [vmem:[%s3 + $0x1c] sm:$0xf]
      %v651 = vld [vmem:[%s4] sm:$0xff]
      %v652 = vld [vmem:[%s4 + $0x8] sm:$0xff]
      %v653 = vld [vmem:[%s4 + $0x10] sm:$0xff]
      %v654 = vld [vmem:[%s4 + $0x18] sm:$0xff]
      %v655 = vld [vmem:[%s4 + $0x20] sm:$0xff]
      %v656 = vld [vmem:[%s4 + $0x28] sm:$0xff]
      %v657 = vld [vmem:[%s4 + $0x30] sm:$0xff]
      %v658 = vld [vmem:[%s4 + $0x38] sm:$0xff]
      %v659 = vpack.c.bf16 %v637, %v635
      %v660 = vpack.c.bf16 %v638, %v636
      %v661 = vpack.c.bf16 %v641, %v639
      %v662 = vpack.c.bf16 %v642, %v640
      %664 = vset.pattern.permute.xlu0 0
      %665 = vperm.xlu0 %664, %v651
      %v666 = vpop.permute.xlu0 %665
      %669 = vset.pattern.permute.xlu0 0
      %670 = vperm.xlu0 %669, %v652
      %v671 = vpop.permute.xlu0 %670
      %674 = vset.pattern.permute.xlu0 0
      %675 = vperm.xlu0 %674, %v653
      %v676 = vpop.permute.xlu0 %675
      %679 = vset.pattern.permute.xlu0 0
      %680 = vperm.xlu0 %679, %v654
      %v681 = vpop.permute.xlu0 %680
      %684 = vset.pattern.permute.xlu0 0
      %685 = vperm.xlu0 %684, %v655
      %v686 = vpop.permute.xlu0 %685
      %689 = vset.pattern.permute.xlu0 0
      %690 = vperm.xlu0 %689, %v656
      %v691 = vpop.permute.xlu0 %690
      %694 = vset.pattern.permute.xlu0 0
      %695 = vperm.xlu0 %694, %v657
      %v696 = vpop.permute.xlu0 %695
      %699 = vset.pattern.permute.xlu0 0
      %700 = vperm.xlu0 %699, %v658
      %v701 = vpop.permute.xlu0 %700
      %v711 = vunpack.c.l.b16 %v643
      %v712 = vunpack.c.l.b16 %v644
      %v713 = vunpack.c.l.b16 %v645
      %v714 = vunpack.c.l.b16 %v646
      %v715 = vunpack.c.l.b16 %v647
      %v716 = vunpack.c.l.b16 %v648
      %v717 = vunpack.c.l.b16 %v649
      %v718 = vunpack.c.l.b16 %v650
      %v719 = vpack.c.b16 %v712, %v711
      %v720 = vpack.c.b16 %v714, %v713
      %v721 = vpack.c.b16 %v716, %v715
      %v722 = vpack.c.b16 %v718, %v717
      %vm723 = vcmask 261120
      %v725 = vsel %vm723, %v719, 0
      %v728 = vsel %vm723, %v720, 0
      %v731 = vsel %vm723, %v721, 0
      %v734 = vsel %vm723, %v722, 0
      %736 = vmatprep.subr.bf16.mxu0 %v660
      %737 = vmatpush1.bf16.msra.mxu0 %v659
      %738 = vmatprep.subr.bf16.mxu0 %v662
      %739 = vmatpush1.bf16.msra.mxu0 %v661
      %740 = vmatprep.subr.bf16.mxu0 0
      %741 = vmatpush1.bf16.msra.mxu0 0
      %742 = vmatprep.subr.bf16.mxu0 0
      %743 = vmatpush1.bf16.msra.mxu0 0
      %744 = vmatprep.subr.bf16.mxu0 0
      %745 = vmatpush1.bf16.msra.mxu0 0
      %746 = vmatprep.subr.bf16.mxu0 0
      %747 = vmatpush1.bf16.msra.mxu0 0
      %748 = vmatprep.subr.bf16.mxu0 0
      %749 = vmatpush1.bf16.msra.mxu0 0
      %750 = vmatprep.subr.bf16.mxu0 0
      %751 = vmatpush1.bf16.msra.mxu0 0
      %752 = vmatprep.subr.bf16.mxu0 0
      %753 = vmatpush1.bf16.msra.mxu0 0
      %754 = vmatprep.subr.bf16.mxu0 0
      %755 = vmatpush1.bf16.msra.mxu0 0
      %756 = vmatprep.subr.bf16.mxu0 0
      %757 = vmatpush1.bf16.msra.mxu0 0
      %758 = vmatprep.subr.bf16.mxu0 0
      %759 = vmatpush1.bf16.msra.mxu0 0
      %760 = vmatprep.subr.bf16.mxu0 0
      %761 = vmatpush1.bf16.msra.mxu0 0
      %762 = vmatprep.subr.bf16.mxu0 0
      %763 = vmatpush1.bf16.msra.mxu0 0
      %764 = vmatprep.subr.bf16.mxu0 0
      %765 = vmatpush1.bf16.msra.mxu0 0
      %766 = vmatprep.subr.bf16.mxu0 0
      %767 = vmatpush1.bf16.msra.mxu0 0
      %768 = vmatprep.mubr.bf16.mxu0 0
      %769 = vmatmul.mubr.bf16.gmra.mrb[0].mxu0 %v725
      %v770 = vpop.f32.mrb[0].mxu0
      %v771 = vadd.f32 %v666, %v770
      %v772 = vpop.f32.mrb[0].mxu0
      %v773 = vadd.f32 %v666, %v772
      %v774 = vpop.f32.mrb[0].mxu0
      %v775 = vadd.f32 %v671, %v774
      %v776 = vpop.f32.mrb[0].mxu0
      %v777 = vadd.f32 %v671, %v776
      %778 = vmatprep.mubr.bf16.mxu0 0
      %779 = vmatmul.mubr.bf16.gmra.mrb[0].mxu0 %v728
      %v780 = vpop.f32.mrb[0].mxu0
      %v781 = vadd.f32 %v676, %v780
      %v782 = vpop.f32.mrb[0].mxu0
      %v783 = vadd.f32 %v676, %v782
      %v784 = vpop.f32.mrb[0].mxu0
      %v785 = vadd.f32 %v681, %v784
      %v786 = vpop.f32.mrb[0].mxu0
      %v787 = vadd.f32 %v681, %v786
      %788 = vmatprep.mubr.bf16.mxu0 0
      %789 = vmatmul.mubr.bf16.gmra.mrb[0].mxu0 %v731
      %v790 = vpop.f32.mrb[0].mxu0
      %v791 = vadd.f32 %v686, %v790
      %v792 = vpop.f32.mrb[0].mxu0
      %v793 = vadd.f32 %v686, %v792
      %v794 = vpop.f32.mrb[0].mxu0
      %v795 = vadd.f32 %v691, %v794
      %v796 = vpop.f32.mrb[0].mxu0
      %v797 = vadd.f32 %v691, %v796
      %798 = vmatprep.mubr.bf16.mxu0 0
      %799 = vmatmul.mubr.bf16.gmra.mrb[0].mxu0 %v734
      %v800 = vpop.f32.mrb[0].mxu0
      %v801 = vadd.f32 %v696, %v800
      %v802 = vpop.f32.mrb[0].mxu0
      %v803 = vadd.f32 %v696, %v802
      %v804 = vpop.f32.mrb[0].mxu0
      %v805 = vadd.f32 %v701, %v804
      %v806 = vpop.f32.mrb[0].mxu0
      %v807 = vadd.f32 %v701, %v806
      %808 = vdwg.mxu0
      %vm809 = vcmp.gt.f32.partialorder %v771, 0.0
      %vm810 = vcmp.gt.f32.partialorder %v773, 0.0
      %vm811 = vcmp.gt.f32.partialorder %v775, 0.0
      %vm812 = vcmp.gt.f32.partialorder %v777, 0.0
      %vm813 = vcmp.gt.f32.partialorder %v781, 0.0
      %vm814 = vcmp.gt.f32.partialorder %v783, 0.0
      %vm815 = vcmp.gt.f32.partialorder %v785, 0.0
      %vm816 = vcmp.gt.f32.partialorder %v787, 0.0
      %vm817 = vcmp.gt.f32.partialorder %v791, 0.0
      %vm818 = vcmp.gt.f32.partialorder %v793, 0.0
      %vm819 = vcmp.gt.f32.partialorder %v795, 0.0
      %vm820 = vcmp.gt.f32.partialorder %v797, 0.0
      %vm821 = vcmp.gt.f32.partialorder %v801, 0.0
      %vm822 = vcmp.gt.f32.partialorder %v803, 0.0
      %vm823 = vcmp.gt.f32.partialorder %v805, 0.0
      %vm824 = vcmp.gt.f32.partialorder %v807, 0.0
      %v825 = vmin.f32 %v771, 0.0
      %v826 = vmin.f32 %v773, 0.0
      %v827 = vmin.f32 %v775, 0.0
      %v828 = vmin.f32 %v777, 0.0
      %v829 = vmin.f32 %v781, 0.0
      %v830 = vmin.f32 %v783, 0.0
      %v831 = vmin.f32 %v785, 0.0
      %v832 = vmin.f32 %v787, 0.0
      %v833 = vmin.f32 %v791, 0.0
      %v834 = vmin.f32 %v793, 0.0
      %v835 = vmin.f32 %v795, 0.0
      %v836 = vmin.f32 %v797, 0.0
      %v837 = vmin.f32 %v801, 0.0
      %v838 = vmin.f32 %v803, 0.0
      %v839 = vmin.f32 %v805, 0.0
      %v840 = vmin.f32 %v807, 0.0
      %v841 = vmul.f32 %v825, 1.442695
      %v842 = vpow.pop %v841
      %v843 = vmul.f32 %v826, 1.442695
      %v844 = vpow.pop %v843
      %v845 = vmul.f32 %v827, 1.442695
      %v846 = vpow.pop %v845
      %v847 = vmul.f32 %v828, 1.442695
      %v848 = vpow.pop %v847
      %v849 = vmul.f32 %v829, 1.442695
      %v850 = vpow.pop %v849
      %v851 = vmul.f32 %v830, 1.442695
      %v852 = vpow.pop %v851
      %v853 = vmul.f32 %v831, 1.442695
      %v854 = vpow.pop %v853
      %v855 = vmul.f32 %v832, 1.442695
      %v856 = vpow.pop %v855
      %v857 = vmul.f32 %v833, 1.442695
      %v858 = vpow.pop %v857
      %v859 = vmul.f32 %v834, 1.442695
      %v860 = vpow.pop %v859
      %v861 = vmul.f32 %v835, 1.442695
      %v862 = vpow.pop %v861
      %v863 = vmul.f32 %v836, 1.442695
      %v864 = vpow.pop %v863
      %v865 = vmul.f32 %v837, 1.442695
      %v866 = vpow.pop %v865
      %v867 = vmul.f32 %v838, 1.442695
      %v868 = vpow.pop %v867
      %v869 = vmul.f32 %v839, 1.442695
      %v870 = vpow.pop %v869
      %v871 = vmul.f32 %v840, 1.442695
      %v872 = vpow.pop %v871
      %v873 = vsub.f32 %v842, 1.0
      %v874 = vsub.f32 %v844, 1.0
      %v875 = vsub.f32 %v846, 1.0
      %v876 = vsub.f32 %v848, 1.0
      %v877 = vsub.f32 %v850, 1.0
      %v878 = vsub.f32 %v852, 1.0
      %v879 = vsub.f32 %v854, 1.0
      %v880 = vsub.f32 %v856, 1.0
      %v881 = vsub.f32 %v858, 1.0
      %v882 = vsub.f32 %v860, 1.0
      %v883 = vsub.f32 %v862, 1.0
      %v884 = vsub.f32 %v864, 1.0
      %v885 = vsub.f32 %v866, 1.0
      %v886 = vsub.f32 %v868, 1.0
      %v887 = vsub.f32 %v870, 1.0
      %v888 = vsub.f32 %v872, 1.0
      %v889 = vsel %vm809, %v771, %v873
      %v890 = vsel %vm810, %v773, %v874
      %v891 = vsel %vm811, %v775, %v875
      %v892 = vsel %vm812, %v777, %v876
      %v893 = vsel %vm813, %v781, %v877
      %v894 = vsel %vm814, %v783, %v878
      %v895 = vsel %vm815, %v785, %v879
      %v896 = vsel %vm816, %v787, %v880
      %v897 = vsel %vm817, %v791, %v881
      %v898 = vsel %vm818, %v793, %v882
      %v899 = vsel %vm819, %v795, %v883
      %v900 = vsel %vm820, %v797, %v884
      %v901 = vsel %vm821, %v801, %v885
      %v902 = vsel %vm822, %v803, %v886
      %v903 = vsel %vm823, %v805, %v887
      %v904 = vsel %vm824, %v807, %v888
      %v905 = vld [vmem:[%s5] sm:$0xf]
      %v906 = vld [vmem:[%s5 + $0x4] sm:$0xf]
      %v907 = vld [vmem:[%s5 + $0x8] sm:$0xf]
      %v908 = vld [vmem:[%s5 + $0xc] sm:$0xf]
      %v909 = vld [vmem:[%s5 + $0x10] sm:$0xf]
      %v910 = vld [vmem:[%s5 + $0x14] sm:$0xf]
      %v911 = vld [vmem:[%s5 + $0x18] sm:$0xf]
      %v912 = vld [vmem:[%s5 + $0x1c] sm:$0xf]
      %v913 = vld [vmem:[%s5 + $0x20] sm:$0xf]
      %v914 = vld [vmem:[%s5 + $0x24] sm:$0xf]
      %v915 = vld [vmem:[%s5 + $0x28] sm:$0xf]
      %v916 = vld [vmem:[%s5 + $0x2c] sm:$0xf]
      %v917 = vld [vmem:[%s5 + $0x30] sm:$0xf]
      %v918 = vld [vmem:[%s5 + $0x34] sm:$0xf]
      %v919 = vld [vmem:[%s5 + $0x38] sm:$0xf]
      %v920 = vld [vmem:[%s5 + $0x3c] sm:$0xf]
      %v921 = vld [vmem:[%s6] sm:$0xff]
      %v922 = vld [vmem:[%s6 + $0x8] sm:$0xff]
      %v923 = vld [vmem:[%s6 + $0x10] sm:$0xff]
      %v924 = vld [vmem:[%s6 + $0x18] sm:$0xff]
      %v925 = vld [vmem:[%s6 + $0x20] sm:$0xff]
      %v926 = vld [vmem:[%s6 + $0x28] sm:$0xff]
      %v927 = vld [vmem:[%s6 + $0x30] sm:$0xff]
      %v928 = vld [vmem:[%s6 + $0x38] sm:$0xff]
      %v929 = vld [vmem:[%s6 + $0x40] sm:$0xff]
      %v930 = vld [vmem:[%s6 + $0x48] sm:$0xff]
      %v931 = vld [vmem:[%s6 + $0x50] sm:$0xff]
      %v932 = vld [vmem:[%s6 + $0x58] sm:$0xff]
      %v933 = vld [vmem:[%s6 + $0x60] sm:$0xff]
      %v934 = vld [vmem:[%s6 + $0x68] sm:$0xff]
      %v935 = vld [vmem:[%s6 + $0x70] sm:$0xff]
      %v936 = vld [vmem:[%s6 + $0x78] sm:$0xff]
      %v937 = vpack.c.bf16 %v891, %v889
      %v938 = vpack.c.bf16 %v892, %v890
      %v939 = vpack.c.bf16 %v895, %v893
      %v940 = vpack.c.bf16 %v896, %v894
      %v941 = vpack.c.bf16 %v899, %v897
      %v942 = vpack.c.bf16 %v900, %v898
      %v943 = vpack.c.bf16 %v903, %v901
      %v944 = vpack.c.bf16 %v904, %v902
      %946 = vset.pattern.permute.xlu0 0
      %947 = vperm.xlu0 %946, %v921
      %v948 = vpop.permute.xlu0 %947
      %951 = vset.pattern.permute.xlu0 0
      %952 = vperm.xlu0 %951, %v922
      %v953 = vpop.permute.xlu0 %952
      %956 = vset.pattern.permute.xlu0 0
      %957 = vperm.xlu0 %956, %v923
      %v958 = vpop.permute.xlu0 %957
      %961 = vset.pattern.permute.xlu0 0
      %962 = vperm.xlu0 %961, %v924
      %v963 = vpop.permute.xlu0 %962
      %966 = vset.pattern.permute.xlu0 0
      %967 = vperm.xlu0 %966, %v925
      %v968 = vpop.permute.xlu0 %967
      %971 = vset.pattern.permute.xlu0 0
      %972 = vperm.xlu0 %971, %v926
      %v973 = vpop.permute.xlu0 %972
      %976 = vset.pattern.permute.xlu0 0
      %977 = vperm.xlu0 %976, %v927
      %v978 = vpop.permute.xlu0 %977
      %981 = vset.pattern.permute.xlu0 0
      %982 = vperm.xlu0 %981, %v928
      %v983 = vpop.permute.xlu0 %982
      %986 = vset.pattern.permute.xlu0 0
      %987 = vperm.xlu0 %986, %v929
      %v988 = vpop.permute.xlu0 %987
      %991 = vset.pattern.permute.xlu0 0
      %992 = vperm.xlu0 %991, %v930
      %v993 = vpop.permute.xlu0 %992
      %996 = vset.pattern.permute.xlu0 0
      %997 = vperm.xlu0 %996, %v931
      %v998 = vpop.permute.xlu0 %997
      %1001 = vset.pattern.permute.xlu0 0
      %1002 = vperm.xlu0 %1001, %v932
      %v1003 = vpop.permute.xlu0 %1002
      %1006 = vset.pattern.permute.xlu0 0
      %1007 = vperm.xlu0 %1006, %v933
      %v1008 = vpop.permute.xlu0 %1007
      %1011 = vset.pattern.permute.xlu0 0
      %1012 = vperm.xlu0 %1011, %v934
      %v1013 = vpop.permute.xlu0 %1012
      %1016 = vset.pattern.permute.xlu0 0
      %1017 = vperm.xlu0 %1016, %v935
      %v1018 = vpop.permute.xlu0 %1017
      %1021 = vset.pattern.permute.xlu0 0
      %1022 = vperm.xlu0 %1021, %v936
      %v1023 = vpop.permute.xlu0 %1022
      %v1041 = vunpack.c.l.b16 %v905
      %v1042 = vunpack.c.l.b16 %v906
      %v1043 = vunpack.c.l.b16 %v907
      %v1044 = vunpack.c.l.b16 %v908
      %v1045 = vunpack.c.l.b16 %v909
      %v1046 = vunpack.c.l.b16 %v910
      %v1047 = vunpack.c.l.b16 %v911
      %v1048 = vunpack.c.l.b16 %v912
      %v1049 = vunpack.c.l.b16 %v913
      %v1050 = vunpack.c.l.b16 %v914
      %v1051 = vunpack.c.l.b16 %v915
      %v1052 = vunpack.c.l.b16 %v916
      %v1053 = vunpack.c.l.b16 %v917
      %v1054 = vunpack.c.l.b16 %v918
      %v1055 = vunpack.c.l.b16 %v919
      %v1056 = vunpack.c.l.b16 %v920
      %v1057 = vpack.c.b16 %v1042, %v1041
      %v1058 = vpack.c.b16 %v1044, %v1043
      %v1059 = vpack.c.b16 %v1046, %v1045
      %v1060 = vpack.c.b16 %v1048, %v1047
      %v1061 = vpack.c.b16 %v1050, %v1049
      %v1062 = vpack.c.b16 %v1052, %v1051
      %v1063 = vpack.c.b16 %v1054, %v1053
      %v1064 = vpack.c.b16 %v1056, %v1055
      %vm1065 = vcmask 523264
      %v1067 = vsel %vm1065, %v1057, 0
      %v1070 = vsel %vm1065, %v1058, 0
      %v1073 = vsel %vm1065, %v1059, 0
      %v1076 = vsel %vm1065, %v1060, 0
      %v1079 = vsel %vm1065, %v1061, 0
      %v1082 = vsel %vm1065, %v1062, 0
      %v1085 = vsel %vm1065, %v1063, 0
      %v1088 = vsel %vm1065, %v1064, 0
      %1090 = vmatprep.subr.bf16.mxu0 %v938
      %1091 = vmatpush1.bf16.msra.mxu0 %v937
      %1092 = vmatprep.subr.bf16.mxu0 %v940
      %1093 = vmatpush1.bf16.msra.mxu0 %v939
      %1094 = vmatprep.subr.bf16.mxu0 %v942
      %1095 = vmatpush1.bf16.msra.mxu0 %v941
      %1096 = vmatprep.subr.bf16.mxu0 %v944
      %1097 = vmatpush1.bf16.msra.mxu0 %v943
      %1098 = vmatprep.subr.bf16.mxu0 0
      %1099 = vmatpush1.bf16.msra.mxu0 0
      %1100 = vmatprep.subr.bf16.mxu0 0
      %1101 = vmatpush1.bf16.msra.mxu0 0
      %1102 = vmatprep.subr.bf16.mxu0 0
      %1103 = vmatpush1.bf16.msra.mxu0 0
      %1104 = vmatprep.subr.bf16.mxu0 0
      %1105 = vmatpush1.bf16.msra.mxu0 0
      %1106 = vmatprep.subr.bf16.mxu0 0
      %1107 = vmatpush1.bf16.msra.mxu0 0
      %1108 = vmatprep.subr.bf16.mxu0 0
      %1109 = vmatpush1.bf16.msra.mxu0 0
      %1110 = vmatprep.subr.bf16.mxu0 0
      %1111 = vmatpush1.bf16.msra.mxu0 0
      %1112 = vmatprep.subr.bf16.mxu0 0
      %1113 = vmatpush1.bf16.msra.mxu0 0
      %1114 = vmatprep.subr.bf16.mxu0 0
      %1115 = vmatpush1.bf16.msra.mxu0 0
      %1116 = vmatprep.subr.bf16.mxu0 0
      %1117 = vmatpush1.bf16.msra.mxu0 0
      %1118 = vmatprep.subr.bf16.mxu0 0
      %1119 = vmatpush1.bf16.msra.mxu0 0
      %1120 = vmatprep.subr.bf16.mxu0 0
      %1121 = vmatpush1.bf16.msra.mxu0 0
      %1122 = vmatprep.mubr.bf16.mxu0 0
      %1123 = vmatmul.mubr.bf16.gmra.mrb[0].mxu0 %v1067
      %v1124 = vpop.f32.mrb[0].mxu0
      %v1125 = vadd.f32 %v948, %v1124
      %v1126 = vpop.f32.mrb[0].mxu0
      %v1127 = vadd.f32 %v948, %v1126
      %v1128 = vpop.f32.mrb[0].mxu0
      %v1129 = vadd.f32 %v953, %v1128
      %v1130 = vpop.f32.mrb[0].mxu0
      %v1131 = vadd.f32 %v953, %v1130
      %1132 = vmatprep.mubr.bf16.mxu0 0
      %1133 = vmatmul.mubr.bf16.gmra.mrb[0].mxu0 %v1070
      %v1134 = vpop.f32.mrb[0].mxu0
      %v1135 = vadd.f32 %v958, %v1134
      %v1136 = vpop.f32.mrb[0].mxu0
      %v1137 = vadd.f32 %v958, %v1136
      %v1138 = vpop.f32.mrb[0].mxu0
      %v1139 = vadd.f32 %v963, %v1138
      %v1140 = vpop.f32.mrb[0].mxu0
      %v1141 = vadd.f32 %v963, %v1140
      %1142 = vmatprep.mubr.bf16.mxu0 0
      %1143 = vmatmul.mubr.bf16.gmra.mrb[0].mxu0 %v1073
      %v1144 = vpop.f32.mrb[0].mxu0
      %v1145 = vadd.f32 %v968, %v1144
      %v1146 = vpop.f32.mrb[0].mxu0
      %v1147 = vadd.f32 %v968, %v1146
      %v1148 = vpop.f32.mrb[0].mxu0
      %v1149 = vadd.f32 %v973, %v1148
      %v1150 = vpop.f32.mrb[0].mxu0
      %v1151 = vadd.f32 %v973, %v1150
      %1152 = vmatprep.mubr.bf16.mxu0 0
      %1153 = vmatmul.mubr.bf16.gmra.mrb[0].mxu0 %v1076
      %v1154 = vpop.f32.mrb[0].mxu0
      %v1155 = vadd.f32 %v978, %v1154
      %v1156 = vpop.f32.mrb[0].mxu0
      %v1157 = vadd.f32 %v978, %v1156
      %v1158 = vpop.f32.mrb[0].mxu0
      %v1159 = vadd.f32 %v983, %v1158
      %v1160 = vpop.f32.mrb[0].mxu0
      %v1161 = vadd.f32 %v983, %v1160
      %1162 = vmatprep.mubr.bf16.mxu0 0
      %1163 = vmatmul.mubr.bf16.gmra.mrb[0].mxu0 %v1079
      %v1164 = vpop.f32.mrb[0].mxu0
      %v1165 = vadd.f32 %v988, %v1164
      %v1166 = vpop.f32.mrb[0].mxu0
      %v1167 = vadd.f32 %v988, %v1166
      %v1168 = vpop.f32.mrb[0].mxu0
      %v1169 = vadd.f32 %v993, %v1168
      %v1170 = vpop.f32.mrb[0].mxu0
      %v1171 = vadd.f32 %v993, %v1170
      %1172 = vmatprep.mubr.bf16.mxu0 0
      %1173 = vmatmul.mubr.bf16.gmra.mrb[0].mxu0 %v1082
      %v1174 = vpop.f32.mrb[0].mxu0
      %v1175 = vadd.f32 %v998, %v1174
      %v1176 = vpop.f32.mrb[0].mxu0
      %v1177 = vadd.f32 %v998, %v1176
      %v1178 = vpop.f32.mrb[0].mxu0
      %v1179 = vadd.f32 %v1003, %v1178
      %v1180 = vpop.f32.mrb[0].mxu0
      %v1181 = vadd.f32 %v1003, %v1180
      %1182 = vmatprep.mubr.bf16.mxu0 0
      %1183 = vmatmul.mubr.bf16.gmra.mrb[0].mxu0 %v1085
      %v1184 = vpop.f32.mrb[0].mxu0
      %v1185 = vadd.f32 %v1008, %v1184
      %v1186 = vpop.f32.mrb[0].mxu0
      %v1187 = vadd.f32 %v1008, %v1186
      %v1188 = vpop.f32.mrb[0].mxu0
      %v1189 = vadd.f32 %v1013, %v1188
      %v1190 = vpop.f32.mrb[0].mxu0
      %v1191 = vadd.f32 %v1013, %v1190
      %1192 = vmatprep.mubr.bf16.mxu0 0
      %1193 = vmatmul.mubr.bf16.gmra.mrb[0].mxu0 %v1088
      %v1194 = vpop.f32.mrb[0].mxu0
      %v1195 = vadd.f32 %v1018, %v1194
      %v1196 = vpop.f32.mrb[0].mxu0
      %v1197 = vadd.f32 %v1018, %v1196
      %v1198 = vpop.f32.mrb[0].mxu0
      %v1199 = vadd.f32 %v1023, %v1198
      %v1200 = vpop.f32.mrb[0].mxu0
      %v1201 = vadd.f32 %v1023, %v1200
      %1202 = vdwg.mxu0
      %vm1203 = vcmp.gt.f32.partialorder %v1125, 0.0
      %vm1204 = vcmp.gt.f32.partialorder %v1127, 0.0
      %vm1205 = vcmp.gt.f32.partialorder %v1129, 0.0
      %vm1206 = vcmp.gt.f32.partialorder %v1131, 0.0
      %vm1207 = vcmp.gt.f32.partialorder %v1135, 0.0
      %vm1208 = vcmp.gt.f32.partialorder %v1137, 0.0
      %vm1209 = vcmp.gt.f32.partialorder %v1139, 0.0
      %vm1210 = vcmp.gt.f32.partialorder %v1141, 0.0
      %vm1211 = vcmp.gt.f32.partialorder %v1145, 0.0
      %vm1212 = vcmp.gt.f32.partialorder %v1147, 0.0
      %vm1213 = vcmp.gt.f32.partialorder %v1149, 0.0
      %vm1214 = vcmp.gt.f32.partialorder %v1151, 0.0
      %vm1215 = vcmp.gt.f32.partialorder %v1155, 0.0
      %vm1216 = vcmp.gt.f32.partialorder %v1157, 0.0
      %vm1217 = vcmp.gt.f32.partialorder %v1159, 0.0
      %vm1218 = vcmp.gt.f32.partialorder %v1161, 0.0
      %vm1219 = vcmp.gt.f32.partialorder %v1165, 0.0
      %vm1220 = vcmp.gt.f32.partialorder %v1167, 0.0
      %vm1221 = vcmp.gt.f32.partialorder %v1169, 0.0
      %vm1222 = vcmp.gt.f32.partialorder %v1171, 0.0
      %vm1223 = vcmp.gt.f32.partialorder %v1175, 0.0
      %vm1224 = vcmp.gt.f32.partialorder %v1177, 0.0
      %vm1225 = vcmp.gt.f32.partialorder %v1179, 0.0
      %vm1226 = vcmp.gt.f32.partialorder %v1181, 0.0
      %vm1227 = vcmp.gt.f32.partialorder %v1185, 0.0
      %vm1228 = vcmp.gt.f32.partialorder %v1187, 0.0
      %vm1229 = vcmp.gt.f32.partialorder %v1189, 0.0
      %vm1230 = vcmp.gt.f32.partialorder %v1191, 0.0
      %vm1231 = vcmp.gt.f32.partialorder %v1195, 0.0
      %vm1232 = vcmp.gt.f32.partialorder %v1197, 0.0
      %vm1233 = vcmp.gt.f32.partialorder %v1199, 0.0
      %vm1234 = vcmp.gt.f32.partialorder %v1201, 0.0
      %v1235 = vmin.f32 %v1125, 0.0
      %v1236 = vmin.f32 %v1127, 0.0
      %v1237 = vmin.f32 %v1129, 0.0
      %v1238 = vmin.f32 %v1131, 0.0
      %v1239 = vmin.f32 %v1135, 0.0
      %v1240 = vmin.f32 %v1137, 0.0
      %v1241 = vmin.f32 %v1139, 0.0
      %v1242 = vmin.f32 %v1141, 0.0
      %v1243 = vmin.f32 %v1145, 0.0
      %v1244 = vmin.f32 %v1147, 0.0
      %v1245 = vmin.f32 %v1149, 0.0
      %v1246 = vmin.f32 %v1151, 0.0
      %v1247 = vmin.f32 %v1155, 0.0
      %v1248 = vmin.f32 %v1157, 0.0
      %v1249 = vmin.f32 %v1159, 0.0
      %v1250 = vmin.f32 %v1161, 0.0
      %v1251 = vmin.f32 %v1165, 0.0
      %v1252 = vmin.f32 %v1167, 0.0
      %v1253 = vmin.f32 %v1169, 0.0
      %v1254 = vmin.f32 %v1171, 0.0
      %v1255 = vmin.f32 %v1175, 0.0
      %v1256 = vmin.f32 %v1177, 0.0
      %v1257 = vmin.f32 %v1179, 0.0
      %v1258 = vmin.f32 %v1181, 0.0
      %v1259 = vmin.f32 %v1185, 0.0
      %v1260 = vmin.f32 %v1187, 0.0
      %v1261 = vmin.f32 %v1189, 0.0
      %v1262 = vmin.f32 %v1191, 0.0
      %v1263 = vmin.f32 %v1195, 0.0
      %v1264 = vmin.f32 %v1197, 0.0
      %v1265 = vmin.f32 %v1199, 0.0
      %v1266 = vmin.f32 %v1201, 0.0
      %v1267 = vmul.f32 %v1235, 1.442695
      %v1268 = vpow.pop %v1267
      %v1269 = vmul.f32 %v1236, 1.442695
      %v1270 = vpow.pop %v1269
      %v1271 = vmul.f32 %v1237, 1.442695
      %v1272 = vpow.pop %v1271
      %v1273 = vmul.f32 %v1238, 1.442695
      %v1274 = vpow.pop %v1273
      %v1275 = vmul.f32 %v1239, 1.442695
      %v1276 = vpow.pop %v1275
      %v1277 = vmul.f32 %v1240, 1.442695
      %v1278 = vpow.pop %v1277
      %v1279 = vmul.f32 %v1241, 1.442695
      %v1280 = vpow.pop %v1279
      %v1281 = vmul.f32 %v1242, 1.442695
      %v1282 = vpow.pop %v1281
      %v1283 = vmul.f32 %v1243, 1.442695
      %v1284 = vpow.pop %v1283
      %v1285 = vmul.f32 %v1244, 1.442695
      %v1286 = vpow.pop %v1285
      %v1287 = vmul.f32 %v1245, 1.442695
      %v1288 = vpow.pop %v1287
      %v1289 = vmul.f32 %v1246, 1.442695
      %v1290 = vpow.pop %v1289
      %v1291 = vmul.f32 %v1247, 1.442695
      %v1292 = vpow.pop %v1291
      %v1293 = vmul.f32 %v1248, 1.442695
      %v1294 = vpow.pop %v1293
      %v1295 = vmul.f32 %v1249, 1.442695
      %v1296 = vpow.pop %v1295
      %v1297 = vmul.f32 %v1250, 1.442695
      %v1298 = vpow.pop %v1297
      %v1299 = vmul.f32 %v1251, 1.442695
      %v1300 = vpow.pop %v1299
      %v1301 = vmul.f32 %v1252, 1.442695
      %v1302 = vpow.pop %v1301
      %v1303 = vmul.f32 %v1253, 1.442695
      %v1304 = vpow.pop %v1303
      %v1305 = vmul.f32 %v1254, 1.442695
      %v1306 = vpow.pop %v1305
      %v1307 = vmul.f32 %v1255, 1.442695
      %v1308 = vpow.pop %v1307
      %v1309 = vmul.f32 %v1256, 1.442695
      %v1310 = vpow.pop %v1309
      %v1311 = vmul.f32 %v1257, 1.442695
      %v1312 = vpow.pop %v1311
      %v1313 = vmul.f32 %v1258, 1.442695
      %v1314 = vpow.pop %v1313
      %v1315 = vmul.f32 %v1259, 1.442695
      %v1316 = vpow.pop %v1315
      %v1317 = vmul.f32 %v1260, 1.442695
      %v1318 = vpow.pop %v1317
      %v1319 = vmul.f32 %v1261, 1.442695
      %v1320 = vpow.pop %v1319
      %v1321 = vmul.f32 %v1262, 1.442695
      %v1322 = vpow.pop %v1321
      %v1323 = vmul.f32 %v1263, 1.442695
      %v1324 = vpow.pop %v1323
      %v1325 = vmul.f32 %v1264, 1.442695
      %v1326 = vpow.pop %v1325
      %v1327 = vmul.f32 %v1265, 1.442695
      %v1328 = vpow.pop %v1327
      %v1329 = vmul.f32 %v1266, 1.442695
      %v1330 = vpow.pop %v1329
      %v1331 = vsub.f32 %v1268, 1.0
      %v1332 = vsub.f32 %v1270, 1.0
      %v1333 = vsub.f32 %v1272, 1.0
      %v1334 = vsub.f32 %v1274, 1.0
      %v1335 = vsub.f32 %v1276, 1.0
      %v1336 = vsub.f32 %v1278, 1.0
      %v1337 = vsub.f32 %v1280, 1.0
      %v1338 = vsub.f32 %v1282, 1.0
      %v1339 = vsub.f32 %v1284, 1.0
      %v1340 = vsub.f32 %v1286, 1.0
      %v1341 = vsub.f32 %v1288, 1.0
      %v1342 = vsub.f32 %v1290, 1.0
      %v1343 = vsub.f32 %v1292, 1.0
      %v1344 = vsub.f32 %v1294, 1.0
      %v1345 = vsub.f32 %v1296, 1.0
      %v1346 = vsub.f32 %v1298, 1.0
      %v1347 = vsub.f32 %v1300, 1.0
      %v1348 = vsub.f32 %v1302, 1.0
      %v1349 = vsub.f32 %v1304, 1.0
      %v1350 = vsub.f32 %v1306, 1.0
      %v1351 = vsub.f32 %v1308, 1.0
      %v1352 = vsub.f32 %v1310, 1.0
      %v1353 = vsub.f32 %v1312, 1.0
      %v1354 = vsub.f32 %v1314, 1.0
      %v1355 = vsub.f32 %v1316, 1.0
      %v1356 = vsub.f32 %v1318, 1.0
      %v1357 = vsub.f32 %v1320, 1.0
      %v1358 = vsub.f32 %v1322, 1.0
      %v1359 = vsub.f32 %v1324, 1.0
      %v1360 = vsub.f32 %v1326, 1.0
      %v1361 = vsub.f32 %v1328, 1.0
      %v1362 = vsub.f32 %v1330, 1.0
      %v1363 = vsel %vm1203, %v1125, %v1331
      %v1364 = vsel %vm1204, %v1127, %v1332
      %v1365 = vsel %vm1205, %v1129, %v1333
      %v1366 = vsel %vm1206, %v1131, %v1334
      %v1367 = vsel %vm1207, %v1135, %v1335
      %v1368 = vsel %vm1208, %v1137, %v1336
      %v1369 = vsel %vm1209, %v1139, %v1337
      %v1370 = vsel %vm1210, %v1141, %v1338
      %v1371 = vsel %vm1211, %v1145, %v1339
      %v1372 = vsel %vm1212, %v1147, %v1340
      %v1373 = vsel %vm1213, %v1149, %v1341
      %v1374 = vsel %vm1214, %v1151, %v1342
      %v1375 = vsel %vm1215, %v1155, %v1343
      %v1376 = vsel %vm1216, %v1157, %v1344
      %v1377 = vsel %vm1217, %v1159, %v1345
      %v1378 = vsel %vm1218, %v1161, %v1346
      %v1379 = vsel %vm1219, %v1165, %v1347
      %v1380 = vsel %vm1220, %v1167, %v1348
      %v1381 = vsel %vm1221, %v1169, %v1349
      %v1382 = vsel %vm1222, %v1171, %v1350
      %v1383 = vsel %vm1223, %v1175, %v1351
      %v1384 = vsel %vm1224, %v1177, %v1352
      %v1385 = vsel %vm1225, %v1179, %v1353
      %v1386 = vsel %vm1226, %v1181, %v1354
      %v1387 = vsel %vm1227, %v1185, %v1355
      %v1388 = vsel %vm1228, %v1187, %v1356
      %v1389 = vsel %vm1229, %v1189, %v1357
      %v1390 = vsel %vm1230, %v1191, %v1358
      %v1391 = vsel %vm1231, %v1195, %v1359
      %v1392 = vsel %vm1232, %v1197, %v1360
      %v1393 = vsel %vm1233, %v1199, %v1361
      %v1394 = vsel %vm1234, %v1201, %v1362
      %v1395 = vld [vmem:[%s7] sm:$0xf]
      %v1396 = vld [vmem:[%s7 + $0x4] sm:$0xf]
      %v1397 = vld [vmem:[%s7 + $0x8] sm:$0xf]
      %v1398 = vld [vmem:[%s7 + $0xc] sm:$0xf]
      %v1399 = vld [vmem:[%s7 + $0x10] sm:$0xf]
      %v1400 = vld [vmem:[%s7 + $0x14] sm:$0xf]
      %v1401 = vld [vmem:[%s7 + $0x18] sm:$0xf]
      %v1402 = vld [vmem:[%s7 + $0x1c] sm:$0xf]
      %v1403 = vld [vmem:[%s8] sm:$0xff]
      %v1404 = vld [vmem:[%s8 + $0x8] sm:$0xff]
      %v1405 = vld [vmem:[%s8 + $0x10] sm:$0xff]
      %v1406 = vld [vmem:[%s8 + $0x18] sm:$0xff]
      %v1407 = vld [vmem:[%s8 + $0x20] sm:$0xff]
      %v1408 = vld [vmem:[%s8 + $0x28] sm:$0xff]
      %v1409 = vld [vmem:[%s8 + $0x30] sm:$0xff]
      %v1410 = vld [vmem:[%s8 + $0x38] sm:$0xff]
      %v1411 = vpack.c.bf16 %v1365, %v1363
      %v1412 = vpack.c.bf16 %v1366, %v1364
      %v1413 = vpack.c.bf16 %v1369, %v1367
      %v1414 = vpack.c.bf16 %v1370, %v1368
      %v1415 = vpack.c.bf16 %v1373, %v1371
      %v1416 = vpack.c.bf16 %v1374, %v1372
      %v1417 = vpack.c.bf16 %v1377, %v1375
      %v1418 = vpack.c.bf16 %v1378, %v1376
      %v1419 = vpack.c.bf16 %v1381, %v1379
      %v1420 = vpack.c.bf16 %v1382, %v1380
      %v1421 = vpack.c.bf16 %v1385, %v1383
      %v1422 = vpack.c.bf16 %v1386, %v1384
      %v1423 = vpack.c.bf16 %v1389, %v1387
      %v1424 = vpack.c.bf16 %v1390, %v1388
      %v1425 = vpack.c.bf16 %v1393, %v1391
      %v1426 = vpack.c.bf16 %v1394, %v1392
      %1428 = vset.pattern.permute.xlu0 0
      %1429 = vperm.xlu0 %1428, %v1403
      %v1430 = vpop.permute.xlu0 %1429
      %1433 = vset.pattern.permute.xlu0 0
      %1434 = vperm.xlu0 %1433, %v1404
      %v1435 = vpop.permute.xlu0 %1434
      %1438 = vset.pattern.permute.xlu0 0
      %1439 = vperm.xlu0 %1438, %v1405
      %v1440 = vpop.permute.xlu0 %1439
      %1443 = vset.pattern.permute.xlu0 0
      %1444 = vperm.xlu0 %1443, %v1406
      %v1445 = vpop.permute.xlu0 %1444
      %1448 = vset.pattern.permute.xlu0 0
      %1449 = vperm.xlu0 %1448, %v1407
      %v1450 = vpop.permute.xlu0 %1449
      %1453 = vset.pattern.permute.xlu0 0
      %1454 = vperm.xlu0 %1453, %v1408
      %v1455 = vpop.permute.xlu0 %1454
      %1458 = vset.pattern.permute.xlu0 0
      %1459 = vperm.xlu0 %1458, %v1409
      %v1460 = vpop.permute.xlu0 %1459
      %1463 = vset.pattern.permute.xlu0 0
      %1464 = vperm.xlu0 %1463, %v1410
      %v1465 = vpop.permute.xlu0 %1464
      %v1475 = vunpack.c.l.b16 %v1395
      %v1476 = vunpack.c.l.b16 %v1396
      %v1477 = vunpack.c.l.b16 %v1397
      %v1478 = vunpack.c.l.b16 %v1398
      %v1479 = vunpack.c.l.b16 %v1399
      %v1480 = vunpack.c.l.b16 %v1400
      %v1481 = vunpack.c.l.b16 %v1401
      %v1482 = vunpack.c.l.b16 %v1402
      %v1483 = vpack.c.b16 %v1476, %v1475
      %v1484 = vpack.c.b16 %v1478, %v1477
      %v1485 = vpack.c.b16 %v1480, %v1479
      %v1486 = vpack.c.b16 %v1482, %v1481
      %1491 = vmatprep.subr.bf16.mxu0 %v1412
      %1492 = vmatpush1.bf16.msra.mxu0 %v1411
      %1493 = vmatprep.subr.bf16.mxu0 %v1414
      %1494 = vmatpush1.bf16.msra.mxu0 %v1413
      %1495 = vmatprep.subr.bf16.mxu0 %v1416
      %1496 = vmatpush1.bf16.msra.mxu0 %v1415
      %1497 = vmatprep.subr.bf16.mxu0 %v1418
      %1498 = vmatpush1.bf16.msra.mxu0 %v1417
      %1499 = vmatprep.subr.bf16.mxu0 %v1420
      %1500 = vmatpush1.bf16.msra.mxu0 %v1419
      %1501 = vmatprep.subr.bf16.mxu0 %v1422
      %1502 = vmatpush1.bf16.msra.mxu0 %v1421
      %1503 = vmatprep.subr.bf16.mxu0 %v1424
      %1504 = vmatpush1.bf16.msra.mxu0 %v1423
      %1505 = vmatprep.subr.bf16.mxu0 %v1426
      %1506 = vmatpush1.bf16.msra.mxu0 %v1425
      %1507 = vmatprep.subr.bf16.mxu0 0
      %1508 = vmatpush1.bf16.msra.mxu0 0
      %1509 = vmatprep.subr.bf16.mxu0 0
      %1510 = vmatpush1.bf16.msra.mxu0 0
      %1511 = vmatprep.subr.bf16.mxu0 0
      %1512 = vmatpush1.bf16.msra.mxu0 0
      %1513 = vmatprep.subr.bf16.mxu0 0
      %1514 = vmatpush1.bf16.msra.mxu0 0
      %1515 = vmatprep.subr.bf16.mxu0 0
      %1516 = vmatpush1.bf16.msra.mxu0 0
      %1517 = vmatprep.subr.bf16.mxu0 0
      %1518 = vmatpush1.bf16.msra.mxu0 0
      %1519 = vmatprep.subr.bf16.mxu0 0
      %1520 = vmatpush1.bf16.msra.mxu0 0
      %1521 = vmatprep.subr.bf16.mxu0 0
      %1522 = vmatpush1.bf16.msra.mxu0 0
      %1523 = vmatprep.mubr.bf16.mxu0 0
      %1524 = vmatmul.mubr.bf16.gmra.mrb[0].mxu0 %v1483
      %v1525 = vpop.f32.mrb[0].mxu0
      %v1526 = vadd.f32 %v1430, %v1525
      %v1527 = vpop.f32.mrb[0].mxu0
      %v1528 = vadd.f32 %v1430, %v1527
      %v1529 = vpop.f32.mrb[0].mxu0
      %v1530 = vadd.f32 %v1435, %v1529
      %v1531 = vpop.f32.mrb[0].mxu0
      %v1532 = vadd.f32 %v1435, %v1531
      %1533 = vmatprep.mubr.bf16.mxu0 0
      %1534 = vmatmul.mubr.bf16.gmra.mrb[0].mxu0 %v1484
      %v1535 = vpop.f32.mrb[0].mxu0
      %v1536 = vadd.f32 %v1440, %v1535
      %v1537 = vpop.f32.mrb[0].mxu0
      %v1538 = vadd.f32 %v1440, %v1537
      %v1539 = vpop.f32.mrb[0].mxu0
      %v1540 = vadd.f32 %v1445, %v1539
      %v1541 = vpop.f32.mrb[0].mxu0
      %v1542 = vadd.f32 %v1445, %v1541
      %1543 = vmatprep.mubr.bf16.mxu0 0
      %1544 = vmatmul.mubr.bf16.gmra.mrb[0].mxu0 %v1485
      %v1545 = vpop.f32.mrb[0].mxu0
      %v1546 = vadd.f32 %v1450, %v1545
      %v1547 = vpop.f32.mrb[0].mxu0
      %v1548 = vadd.f32 %v1450, %v1547
      %v1549 = vpop.f32.mrb[0].mxu0
      %v1550 = vadd.f32 %v1455, %v1549
      %v1551 = vpop.f32.mrb[0].mxu0
      %v1552 = vadd.f32 %v1455, %v1551
      %1553 = vmatprep.mubr.bf16.mxu0 0
      %1554 = vmatmul.mubr.bf16.gmra.mrb[0].mxu0 %v1486
      %v1555 = vpop.f32.mrb[0].mxu0
      %v1556 = vadd.f32 %v1460, %v1555
      %v1557 = vpop.f32.mrb[0].mxu0
      %v1558 = vadd.f32 %v1460, %v1557
      %v1559 = vpop.f32.mrb[0].mxu0
      %v1560 = vadd.f32 %v1465, %v1559
      %v1561 = vpop.f32.mrb[0].mxu0
      %v1562 = vadd.f32 %v1465, %v1561
      %1563 = vdwg.mxu0
      %vm1564 = vcmp.gt.f32.partialorder %v1526, 0.0
      %vm1565 = vcmp.gt.f32.partialorder %v1528, 0.0
      %vm1566 = vcmp.gt.f32.partialorder %v1530, 0.0
      %vm1567 = vcmp.gt.f32.partialorder %v1532, 0.0
      %vm1568 = vcmp.gt.f32.partialorder %v1536, 0.0
      %vm1569 = vcmp.gt.f32.partialorder %v1538, 0.0
      %vm1570 = vcmp.gt.f32.partialorder %v1540, 0.0
      %vm1571 = vcmp.gt.f32.partialorder %v1542, 0.0
      %vm1572 = vcmp.gt.f32.partialorder %v1546, 0.0
      %vm1573 = vcmp.gt.f32.partialorder %v1548, 0.0
      %vm1574 = vcmp.gt.f32.partialorder %v1550, 0.0
      %vm1575 = vcmp.gt.f32.partialorder %v1552, 0.0
      %vm1576 = vcmp.gt.f32.partialorder %v1556, 0.0
      %vm1577 = vcmp.gt.f32.partialorder %v1558, 0.0
      %vm1578 = vcmp.gt.f32.partialorder %v1560, 0.0
      %vm1579 = vcmp.gt.f32.partialorder %v1562, 0.0
      %v1580 = vmin.f32 %v1526, 0.0
      %v1581 = vmin.f32 %v1528, 0.0
      %v1582 = vmin.f32 %v1530, 0.0
      %v1583 = vmin.f32 %v1532, 0.0
      %v1584 = vmin.f32 %v1536, 0.0
      %v1585 = vmin.f32 %v1538, 0.0
      %v1586 = vmin.f32 %v1540, 0.0
      %v1587 = vmin.f32 %v1542, 0.0
      %v1588 = vmin.f32 %v1546, 0.0
      %v1589 = vmin.f32 %v1548, 0.0
      %v1590 = vmin.f32 %v1550, 0.0
      %v1591 = vmin.f32 %v1552, 0.0
      %v1592 = vmin.f32 %v1556, 0.0
      %v1593 = vmin.f32 %v1558, 0.0
      %v1594 = vmin.f32 %v1560, 0.0
      %v1595 = vmin.f32 %v1562, 0.0
      %v1596 = vmul.f32 %v1580, 1.442695
      %v1597 = vpow.pop %v1596
      %v1598 = vmul.f32 %v1581, 1.442695
      %v1599 = vpow.pop %v1598
      %v1600 = vmul.f32 %v1582, 1.442695
      %v1601 = vpow.pop %v1600
      %v1602 = vmul.f32 %v1583, 1.442695
      %v1603 = vpow.pop %v1602
      %v1604 = vmul.f32 %v1584, 1.442695
      %v1605 = vpow.pop %v1604
      %v1606 = vmul.f32 %v1585, 1.442695
      %v1607 = vpow.pop %v1606
      %v1608 = vmul.f32 %v1586, 1.442695
      %v1609 = vpow.pop %v1608
      %v1610 = vmul.f32 %v1587, 1.442695
      %v1611 = vpow.pop %v1610
      %v1612 = vmul.f32 %v1588, 1.442695
      %v1613 = vpow.pop %v1612
      %v1614 = vmul.f32 %v1589, 1.442695
      %v1615 = vpow.pop %v1614
      %v1616 = vmul.f32 %v1590, 1.442695
      %v1617 = vpow.pop %v1616
      %v1618 = vmul.f32 %v1591, 1.442695
      %v1619 = vpow.pop %v1618
      %v1620 = vmul.f32 %v1592, 1.442695
      %v1621 = vpow.pop %v1620
      %v1622 = vmul.f32 %v1593, 1.442695
      %v1623 = vpow.pop %v1622
      %v1624 = vmul.f32 %v1594, 1.442695
      %v1625 = vpow.pop %v1624
      %v1626 = vmul.f32 %v1595, 1.442695
      %v1627 = vpow.pop %v1626
      %v1628 = vsub.f32 %v1597, 1.0
      %v1629 = vsub.f32 %v1599, 1.0
      %v1630 = vsub.f32 %v1601, 1.0
      %v1631 = vsub.f32 %v1603, 1.0
      %v1632 = vsub.f32 %v1605, 1.0
      %v1633 = vsub.f32 %v1607, 1.0
      %v1634 = vsub.f32 %v1609, 1.0
      %v1635 = vsub.f32 %v1611, 1.0
      %v1636 = vsub.f32 %v1613, 1.0
      %v1637 = vsub.f32 %v1615, 1.0
      %v1638 = vsub.f32 %v1617, 1.0
      %v1639 = vsub.f32 %v1619, 1.0
      %v1640 = vsub.f32 %v1621, 1.0
      %v1641 = vsub.f32 %v1623, 1.0
      %v1642 = vsub.f32 %v1625, 1.0
      %v1643 = vsub.f32 %v1627, 1.0
      %v1644 = vsel %vm1564, %v1526, %v1628
      %v1645 = vsel %vm1565, %v1528, %v1629
      %v1646 = vsel %vm1566, %v1530, %v1630
      %v1647 = vsel %vm1567, %v1532, %v1631
      %v1648 = vsel %vm1568, %v1536, %v1632
      %v1649 = vsel %vm1569, %v1538, %v1633
      %v1650 = vsel %vm1570, %v1540, %v1634
      %v1651 = vsel %vm1571, %v1542, %v1635
      %v1652 = vsel %vm1572, %v1546, %v1636
      %v1653 = vsel %vm1573, %v1548, %v1637
      %v1654 = vsel %vm1574, %v1550, %v1638
      %v1655 = vsel %vm1575, %v1552, %v1639
      %v1656 = vsel %vm1576, %v1556, %v1640
      %v1657 = vsel %vm1577, %v1558, %v1641
      %v1658 = vsel %vm1578, %v1560, %v1642
      %v1659 = vsel %vm1579, %v1562, %v1643
      %v1660 = vld [vmem:[%s9] sm:$0xf]
      %v1661 = vld [vmem:[%s9 + $0x4] sm:$0xf]
      %v1662 = vld [vmem:[%s9 + $0x8] sm:$0xf]
      %v1663 = vld [vmem:[%s9 + $0xc] sm:$0xf]
      %v1664 = vld [vmem:[%s10] sm:$0xff]
      %v1665 = vld [vmem:[%s10 + $0x8] sm:$0xff]
      %v1666 = vld [vmem:[%s10 + $0x10] sm:$0xff]
      %v1667 = vld [vmem:[%s10 + $0x18] sm:$0xff]
      %v1668 = vpack.c.bf16 %v1646, %v1644
      %v1669 = vpack.c.bf16 %v1647, %v1645
      %v1670 = vpack.c.bf16 %v1650, %v1648
      %v1671 = vpack.c.bf16 %v1651, %v1649
      %v1672 = vpack.c.bf16 %v1654, %v1652
      %v1673 = vpack.c.bf16 %v1655, %v1653
      %v1674 = vpack.c.bf16 %v1658, %v1656
      %v1675 = vpack.c.bf16 %v1659, %v1657
      %1677 = vset.pattern.permute.xlu0 0
      %1678 = vperm.xlu0 %1677, %v1664
      %v1679 = vpop.permute.xlu0 %1678
      %1682 = vset.pattern.permute.xlu0 0
      %1683 = vperm.xlu0 %1682, %v1665
      %v1684 = vpop.permute.xlu0 %1683
      %1687 = vset.pattern.permute.xlu0 0
      %1688 = vperm.xlu0 %1687, %v1666
      %v1689 = vpop.permute.xlu0 %1688
      %1692 = vset.pattern.permute.xlu0 0
      %1693 = vperm.xlu0 %1692, %v1667
      %v1694 = vpop.permute.xlu0 %1693
      %v1700 = vunpack.c.l.b16 %v1660
      %v1701 = vunpack.c.l.b16 %v1661
      %v1702 = vunpack.c.l.b16 %v1662
      %v1703 = vunpack.c.l.b16 %v1663
      %v1704 = vpack.c.b16 %v1701, %v1700
      %v1705 = vpack.c.b16 %v1703, %v1702
      %v1707 = vsel %vm1065, %v1704, 0
      %v1710 = vsel %vm1065, %v1705, 0
      %1712 = vmatprep.subr.bf16.mxu0 %v1669
      %1713 = vmatpush1.bf16.msra.mxu0 %v1668
      %1714 = vmatprep.subr.bf16.mxu0 %v1671
      %1715 = vmatpush1.bf16.msra.mxu0 %v1670
      %1716 = vmatprep.subr.bf16.mxu0 %v1673
      %1717 = vmatpush1.bf16.msra.mxu0 %v1672
      %1718 = vmatprep.subr.bf16.mxu0 %v1675
      %1719 = vmatpush1.bf16.msra.mxu0 %v1674
      %1720 = vmatprep.subr.bf16.mxu0 0
      %1721 = vmatpush1.bf16.msra.mxu0 0
      %1722 = vmatprep.subr.bf16.mxu0 0
      %1723 = vmatpush1.bf16.msra.mxu0 0
      %1724 = vmatprep.subr.bf16.mxu0 0
      %1725 = vmatpush1.bf16.msra.mxu0 0
      %1726 = vmatprep.subr.bf16.mxu0 0
      %1727 = vmatpush1.bf16.msra.mxu0 0
      %1728 = vmatprep.subr.bf16.mxu0 0
      %1729 = vmatpush1.bf16.msra.mxu0 0
      %1730 = vmatprep.subr.bf16.mxu0 0
      %1731 = vmatpush1.bf16.msra.mxu0 0
      %1732 = vmatprep.subr.bf16.mxu0 0
      %1733 = vmatpush1.bf16.msra.mxu0 0
      %1734 = vmatprep.subr.bf16.mxu0 0
      %1735 = vmatpush1.bf16.msra.mxu0 0
      %1736 = vmatprep.subr.bf16.mxu0 0
      %1737 = vmatpush1.bf16.msra.mxu0 0
      %1738 = vmatprep.subr.bf16.mxu0 0
      %1739 = vmatpush1.bf16.msra.mxu0 0
      %1740 = vmatprep.subr.bf16.mxu0 0
      %1741 = vmatpush1.bf16.msra.mxu0 0
      %1742 = vmatprep.subr.bf16.mxu0 0
      %1743 = vmatpush1.bf16.msra.mxu0 0
      %1744 = vmatprep.mubr.bf16.mxu0 0
      %1745 = vmatmul.mubr.bf16.gmra.mrb[0].mxu0 %v1707
      %v1746 = vpop.f32.mrb[0].mxu0
      %v1747 = vadd.f32 %v1679, %v1746
      %v1748 = vpop.f32.mrb[0].mxu0
      %v1749 = vadd.f32 %v1679, %v1748
      %v1750 = vpop.f32.mrb[0].mxu0
      %v1751 = vadd.f32 %v1684, %v1750
      %v1752 = vpop.f32.mrb[0].mxu0
      %v1753 = vadd.f32 %v1684, %v1752
      %1754 = vmatprep.mubr.bf16.mxu0 0
      %1755 = vmatmul.mubr.bf16.gmra.mrb[0].mxu0 %v1710
      %v1756 = vpop.f32.mrb[0].mxu0
      %v1757 = vadd.f32 %v1689, %v1756
      %v1758 = vpop.f32.mrb[0].mxu0
      %v1759 = vadd.f32 %v1689, %v1758
      %v1760 = vpop.f32.mrb[0].mxu0
      %v1761 = vadd.f32 %v1694, %v1760
      %v1762 = vpop.f32.mrb[0].mxu0
      %v1763 = vadd.f32 %v1694, %v1762
      %1764 = vdwg.mxu0
      %vm1765 = vcmp.gt.f32.partialorder %v1747, 0.0
      %vm1766 = vcmp.gt.f32.partialorder %v1749, 0.0
      %vm1767 = vcmp.gt.f32.partialorder %v1751, 0.0
      %vm1768 = vcmp.gt.f32.partialorder %v1753, 0.0
      %vm1769 = vcmp.gt.f32.partialorder %v1757, 0.0
      %vm1770 = vcmp.gt.f32.partialorder %v1759, 0.0
      %vm1771 = vcmp.gt.f32.partialorder %v1761, 0.0
      %vm1772 = vcmp.gt.f32.partialorder %v1763, 0.0
      %v1773 = vmin.f32 %v1747, 0.0
      %v1774 = vmin.f32 %v1749, 0.0
      %v1775 = vmin.f32 %v1751, 0.0
      %v1776 = vmin.f32 %v1753, 0.0
      %v1777 = vmin.f32 %v1757, 0.0
      %v1778 = vmin.f32 %v1759, 0.0
      %v1779 = vmin.f32 %v1761, 0.0
      %v1780 = vmin.f32 %v1763, 0.0
      %v1781 = vmul.f32 %v1773, 1.442695
      %v1782 = vpow.pop %v1781
      %v1783 = vmul.f32 %v1774, 1.442695
      %v1784 = vpow.pop %v1783
      %v1785 = vmul.f32 %v1775, 1.442695
      %v1786 = vpow.pop %v1785
      %v1787 = vmul.f32 %v1776, 1.442695
      %v1788 = vpow.pop %v1787
      %v1789 = vmul.f32 %v1777, 1.442695
      %v1790 = vpow.pop %v1789
      %v1791 = vmul.f32 %v1778, 1.442695
      %v1792 = vpow.pop %v1791
      %v1793 = vmul.f32 %v1779, 1.442695
      %v1794 = vpow.pop %v1793
      %v1795 = vmul.f32 %v1780, 1.442695
      %v1796 = vpow.pop %v1795
      %v1797 = vsub.f32 %v1782, 1.0
      %v1798 = vsub.f32 %v1784, 1.0
      %v1799 = vsub.f32 %v1786, 1.0
      %v1800 = vsub.f32 %v1788, 1.0
      %v1801 = vsub.f32 %v1790, 1.0
      %v1802 = vsub.f32 %v1792, 1.0
      %v1803 = vsub.f32 %v1794, 1.0
      %v1804 = vsub.f32 %v1796, 1.0
      %v1805 = vsel %vm1765, %v1747, %v1797
      %v1806 = vsel %vm1766, %v1749, %v1798
      %v1807 = vsel %vm1767, %v1751, %v1799
      %v1808 = vsel %vm1768, %v1753, %v1800
      %v1809 = vsel %vm1769, %v1757, %v1801
      %v1810 = vsel %vm1770, %v1759, %v1802
      %v1811 = vsel %vm1771, %v1761, %v1803
      %v1812 = vsel %vm1772, %v1763, %v1804
      %v1813 = vld [vmem:[%s11] sm:$0x3]
      %v1814 = vld [vmem:[%s12] sm:$0x7]
      %v1815 = vpack.c.bf16 %v1807, %v1805
      %v1816 = vpack.c.bf16 %v1808, %v1806
      %v1817 = vpack.c.bf16 %v1811, %v1809
      %v1818 = vpack.c.bf16 %v1812, %v1810
      %1820 = vset.pattern.permute.xlu0 0
      %1821 = vperm.xlu0 %1820, %v1814
      %v1822 = vpop.permute.xlu0 %1821
      %v1825 = vsel %vm723, %v1813, 0
      %1827 = vmatprep.subr.bf16.mxu0 %v1816
      %1828 = vmatpush1.bf16.msra.mxu0 %v1815
      %1829 = vmatprep.subr.bf16.mxu0 %v1818
      %1830 = vmatpush1.bf16.msra.mxu0 %v1817
      %1831 = vmatprep.subr.bf16.mxu0 0
      %1832 = vmatpush1.bf16.msra.mxu0 0
      %1833 = vmatprep.subr.bf16.mxu0 0
      %1834 = vmatpush1.bf16.msra.mxu0 0
      %1835 = vmatprep.subr.bf16.mxu0 0
      %1836 = vmatpush1.bf16.msra.mxu0 0
      %1837 = vmatprep.subr.bf16.mxu0 0
      %1838 = vmatpush1.bf16.msra.mxu0 0
      %1839 = vmatprep.subr.bf16.mxu0 0
      %1840 = vmatpush1.bf16.msra.mxu0 0
      %1841 = vmatprep.subr.bf16.mxu0 0
      %1842 = vmatpush1.bf16.msra.mxu0 0
      %1843 = vmatprep.subr.bf16.mxu0 0
      %1844 = vmatpush1.bf16.msra.mxu0 0
      %1845 = vmatprep.subr.bf16.mxu0 0
      %1846 = vmatpush1.bf16.msra.mxu0 0
      %1847 = vmatprep.subr.bf16.mxu0 0
      %1848 = vmatpush1.bf16.msra.mxu0 0
      %1849 = vmatprep.subr.bf16.mxu0 0
      %1850 = vmatpush1.bf16.msra.mxu0 0
      %1851 = vmatprep.subr.bf16.mxu0 0
      %1852 = vmatpush1.bf16.msra.mxu0 0
      %1853 = vmatprep.subr.bf16.mxu0 0
      %1854 = vmatpush1.bf16.msra.mxu0 0
      %1855 = vmatprep.subr.bf16.mxu0 0
      %1856 = vmatpush1.bf16.msra.mxu0 0
      %1857 = vmatprep.subr.bf16.mxu0 0
      %1858 = vmatpush1.bf16.msra.mxu0 0
      %1859 = vmatprep.mubr.bf16.mxu0 0
      %1860 = vmatmul.mubr.bf16.gmra.mrb[0].mxu0 %v1825
      %v1861 = vpop.f32.mrb[0].mxu0
      %v1862 = vadd.f32 %v1822, %v1861
      %v1863 = vpop.f32.mrb[0].mxu0
      %v1864 = vadd.f32 %v1822, %v1863
      %v1865 = vpop.f32.mrb[0].mxu0
      %v1866 = vpop.f32.mrb[0].mxu0
      %1867 = vdwg.mxu0
      %v1870 = vcombine.low %v1862, %v1864
      %1872 = vst [vmem:[%s478] sm:$0x77] %v1870
      %s1873 = smul.u32 2, %s29
      %p1874 = scmp.lt.s32.totalorder %s28, 1
      %s1875 = scalar_select %p1874, %s28, 1
      %p1876 = scmp.lt.s32.totalorder %s1873, 1
      %s1877 = scalar_select %p1876, %s1873, 1
      %s1878 = smul.addr %s1875, 2
      %s1879 = sadd.s32 %s1877, %s1878
      %s1880 = smul.addr %s1879, 4
      %s1881 = scalar_lea.vmem %s13, %s1880
      // Predicated region
      $region73: #{tpu_custom_call.1} parent=71 // pred_check
        %p1882 = pneg %p336
      $region74: #{tpu_custom_call.1} parent=71 // pred_check_branch
        %1884 = sbr.rel (%p1882) target = $region76
      $region75: #{tpu_custom_call.1} parent=71 // pred_region
        %s1885 = smul.u32 2, %s29
      $region76: #{tpu_custom_call.1} parent=71 // pred_fallthru
        _
    $region72: #{tpu_custom_call.1} parent=5 // pred_fallthru
      _
    %p1886 = scmp.le.s32.totalorder 2, %s19
    // Predicated region
    $region77: #{tpu_custom_call.1} parent=5 // pred_check
      %p1887 = pneg %p1886
    $region78: #{tpu_custom_call.1} parent=5 // pred_check_branch
      %1889 = sbr.rel (%p1887) target = $region80
    $region79: #{tpu_custom_call.1} parent=5 // pred_region
      %s1890 = ssub.s32 %s19, 2
      // Predicated region
      $region81: #{tpu_custom_call.1} parent=79 // pred_check
        %p1891 = pneg %p342
      $region82: #{tpu_custom_call.1} parent=79 // pred_check_branch
        %1893 = sbr.rel (%p1891) target = $region84
      $region83: #{tpu_custom_call.1} parent=79 // pred_region
        %s1894 = smul.u32 2, %s31
        %p1895 = scmp.lt.s32.totalorder %s30, 1
        %s1896 = scalar_select %p1895, %s30, 1
        %p1897 = scmp.lt.s32.totalorder %s1894, 1
        %s1898 = scalar_select %p1897, %s1894, 1
        %s1899 = smul.addr %s1896, 2
        %s1900 = sadd.s32 %s1898, %s1899
        %s1901 = smul.addr %s1900, 4
        %s1902 = scalar_lea.vmem %s13, %s1901
      $region84: #{tpu_custom_call.1} parent=79 // pred_fallthru
        _
    $region80: #{tpu_custom_call.1} parent=5 // pred_fallthru
      _
  $region6: #{tpu_custom_call.1} parent=0 // loop_footer
    %s23 = sadd.s32 1, %s19
  $region7: #{tpu_custom_call.1} parent=0 // loop_footer_branch
    %18 = sbr.rel target = $region3
  $region8: #{tpu_custom_call.1} parent=0 // loop_exit
    _

</llo_original>
